<compile_context>
chip_gen: v5e
topology: v5e:2x2
jax: 0.10.0
libtpu: 0.0.40
codegen_flags: <defaults>
</compile_context>

<pallas_src>
import math

import jax
import jax.numpy as jnp
from jax import lax
from jax.experimental import pallas as pl
from jax.experimental.pallas import tpu as pltpu


def _leaky_relu(h, slope=0.2):
    return jnp.where(h > 0, h, slope * h)


def disc_kernel(x_ref, w1_ref, b1_ref, w2_ref, b2_ref,
                w3_ref, b3_ref, w4_ref, b4_ref, o_ref):
    # x is DMA'd in its HBM dtype; bf16 cast happens here on the VPU (free filler).
    x = x_ref[...].astype(jnp.bfloat16)

    # fc1 + LeakyReLU(0.2)   (dropout = identity in eval mode)
    h = jnp.dot(x, w1_ref[...], preferred_element_type=jnp.float32) + b1_ref[...]
    h = _leaky_relu(h)
    # fc2 + LeakyReLU(0.2)
    h = jnp.dot(h.astype(jnp.bfloat16), w2_ref[...],
                preferred_element_type=jnp.float32) + b2_ref[...]
    h = _leaky_relu(h)
    # fc3 + LeakyReLU(0.2)
    h = jnp.dot(h.astype(jnp.bfloat16), w3_ref[...],
                preferred_element_type=jnp.float32) + b3_ref[...]
    h = _leaky_relu(h)
    # fc4: a (K=32, N=1) matmul wastes 127/128 MXU lanes and forces a masked
    # (tile_b, 1) column store.  Instead contract the zero-padded (8, h1) bf16
    # weight row against bf16 h with the rhs transposed -> (8, tile_b); row 0 is
    # the logit row, already lane-dense for the output store.
    logits8 = lax.dot_general(w4_ref[...], h.astype(jnp.bfloat16),
                              dimension_numbers=(((1,), (1,)), ((), ())),
                              preferred_element_type=jnp.float32)   # (8, tile_b)
    o_ref[...] = logits8[0:1, :] + b4_ref[...]                      # (1, tile_b)


def _round_up(x, m):
    return ((x + m - 1) // m) * m


def _choose_tile_b(B, cap=2048):
    """Lane-dense (multiple-of-256) batch tile, <= cap rows.

    For B > 512 the tile is sized to ~B/2 so the grid has >= 2 steps and the
    'parallel' batch axis can shard across v7x's two TensorCores; on v5e/v6e
    (single TC) extra tiles just amortize per-step overhead.
    """
    if B <= 512:
        return 256
    return min(cap, _round_up(pl.cdiv(B, 2), 256))


def discriminator_vanilla(x, params, *, tile_b=None):
    """x: (B, 1, 28, 28) or (B, 784) float32/bf16 -> (B, 1) float32 logits."""
    x2 = x.reshape(-1, 28 * 28)
    B = x2.shape[0]
    if tile_b is None:
        tile_b = _choose_tile_b(B)
    num_tiles = pl.cdiv(B, tile_b)
    b_pad = num_tiles * tile_b
    if b_pad != B:
        # pad in x's own dtype; bf16 cast happens inside the kernel
        x2 = jnp.pad(x2, ((0, b_pad - B), (0, 0)))

    w1, b1, w2, b2, w3, b3, w4, b4 = params
    w1b = w1.astype(jnp.bfloat16)
    w2b = w2.astype(jnp.bfloat16)
    w3b = w3.astype(jnp.bfloat16)
    h1 = w3.shape[1]
    # fc4 weight as an (8, h1) bf16 slab: row 0 = w4^T, rows 1..7 = 0 (keeps the
    # final dot at MXU-friendly M=8; extra rows are free and sliced off).
    w4r = jnp.pad(w4.reshape(1, h1), ((0, 7), (0, 0))).astype(jnp.bfloat16)
    b4r = b4.reshape(1, 1).astype(jnp.float32)

    d_in = w1b.shape[0]
    h4, h2 = w1b.shape[1], w2b.shape[1]

    full = lambda shape: pl.BlockSpec(shape, lambda i: (0, 0))

    out = pl.pallas_call(
        disc_kernel,
        out_shape=jax.ShapeDtypeStruct((num_tiles, tile_b), jnp.float32),
        grid_spec=pltpu.PrefetchScalarGridSpec(
            num_scalar_prefetch=0,
            grid=(num_tiles,),
            in_specs=[
                pl.BlockSpec((tile_b, d_in), lambda i: (i, 0)),  # x tile (src dtype)
                full((d_in, h4)), full((1, h4)),                 # fc1 (bf16 w, f32 b)
                full((h4, h2)),   full((1, h2)),                 # fc2
                full((h2, h1)),   full((1, h1)),                 # fc3
                full((8, h1)),    full((1, 1)),                  # fc4 row + bias
            ],
            # Lane-dense output: one (1, tile_b) row per grid step.
            out_specs=pl.BlockSpec((1, tile_b), lambda i: (i, 0)),
        ),
        compiler_params=pltpu.CompilerParams(
            dimension_semantics=("parallel",),
            # v5e defaults to 16 MiB scoped VMEM; the double-buffered f32 x tile at
            # tile_b=2048 is ~12.5 MiB + weights/temps, so raise the limit explicitly.
            vmem_limit_bytes=32 << 20,
        ),
    )(x2, w1b, b1, w2b, b2, w3b, b3, w4r, b4r)

    # (num_tiles, tile_b) row-major == batch order; drop padded rows.
    return out.reshape(b_pad, 1)[:B]


def init_params(key, input_size=28 * 28, hidden_dim=32):
    """Deterministic init matching the PyTorch module's shapes.

    fc1..fc3 weights: xavier_uniform_, fc4 weight: PyTorch default (kaiming-uniform
    bound = 1/sqrt(fan_in)); all biases: PyTorch default uniform(-1/sqrt(fan_in), ...).
    Weights are returned transposed: (in_features, out_features), all float32.
    """
    dims = [input_size, hidden_dim * 4, hidden_dim * 2, hidden_dim, 1]
    keys = jax.random.split(key, 8)
    params = []
    for li in range(4):
        fan_in, fan_out = dims[li], dims[li + 1]
        wk, bk = keys[2 * li], keys[2 * li + 1]
        if li < 3:  # xavier_uniform_
            bound = math.sqrt(6.0 / (fan_in + fan_out))
        else:       # PyTorch Linear default weight init bound
            bound = 1.0 / math.sqrt(fan_in)
        w_t = jax.random.uniform(wk, (fan_in, fan_out), jnp.float32, -bound, bound)
        b_bound = 1.0 / math.sqrt(fan_in)
        b = jax.random.uniform(bk, (1, fan_out), jnp.float32, -b_bound, b_bound)
        params += [w_t, b]
    return tuple(params)


def reference_forward(x, params):
    """Pure-JAX reference mirroring the kernel's bf16-operand / f32-accumulate math."""
    w1, b1, w2, b2, w3, b3, w4, b4 = params
    h = x.reshape(-1, 28 * 28).astype(jnp.bfloat16)
    h = jax.nn.leaky_relu(
        jnp.dot(h, w1.astype(jnp.bfloat16), preferred_element_type=jnp.float32) + b1, 0.2)
    h = jax.nn.leaky_relu(
        jnp.dot(h.astype(jnp.bfloat16), w2.astype(jnp.bfloat16),
                preferred_element_type=jnp.float32) + b2, 0.2)
    h = jax.nn.leaky_relu(
        jnp.dot(h.astype(jnp.bfloat16), w3.astype(jnp.bfloat16),
                preferred_element_type=jnp.float32) + b3, 0.2)
    return jnp.dot(h.astype(jnp.bfloat16), w4.astype(jnp.bfloat16),
                   preferred_element_type=jnp.float32) + b4


if __name__ == "__main__":
    key = jax.random.PRNGKey(0)
    pkey, xkey = jax.random.split(key)

    hidden_dim = 32
    params = init_params(pkey, input_size=28 * 28, hidden_dim=hidden_dim)

    # Small MNIST-like batch: (B=8, C=1, H=28, W=28); wrapper pads to one 256-row tile.
    x = jax.random.normal(xkey, (8, 1, 28, 28), jnp.float32)

    out = discriminator_vanilla(x, params)
    out = jax.block_until_ready(out)

    ref = reference_forward(x, params)
    assert out.shape == (8, 1), out.shape
    assert jnp.allclose(out, ref, atol=1e-2, rtol=1e-2), "mismatch vs JAX reference"

    print("KERNEL_OK")
</pallas_src>

<mosaic_0001>
module attributes {stable_mosaic.version = 11 : i64} {
  func.func @disc_kernel(%arg0: i32, %arg1: memref<256x784xf32, #tpu.memory_space<vmem>>, %arg2: memref<784x128xbf16, #tpu.memory_space<vmem>>, %arg3: memref<1x128xf32, #tpu.memory_space<vmem>>, %arg4: memref<128x64xbf16, #tpu.memory_space<vmem>>, %arg5: memref<1x64xf32, #tpu.memory_space<vmem>>, %arg6: memref<64x32xbf16, #tpu.memory_space<vmem>>, %arg7: memref<1x32xf32, #tpu.memory_space<vmem>>, %arg8: memref<8x32xbf16, #tpu.memory_space<vmem>>, %arg9: memref<1x1xf32, #tpu.memory_space<vmem>>, %arg10: memref<1x256xf32, #tpu.memory_space<vmem>>) attributes {dimension_semantics = [#tpu.dimension_semantics<parallel>], iteration_bounds = array<i64: 1>, scalar_prefetch = 0 : i64, scratch_operands = 0 : i64, tpu.core_type = #tpu.core_type<tc>, window_params = [{transform_indices = @transform_0, window_bounds = array<i64: 256, 784>}, {pipeline_mode = #tpu.pipeline_mode<synchronous>, transform_indices = @transform_1, window_bounds = array<i64: 784, 128>}, {pipeline_mode = #tpu.pipeline_mode<synchronous>, transform_indices = @transform_2, window_bounds = array<i64: 1, 128>}, {pipeline_mode = #tpu.pipeline_mode<synchronous>, transform_indices = @transform_3, window_bounds = array<i64: 128, 64>}, {pipeline_mode = #tpu.pipeline_mode<synchronous>, transform_indices = @transform_4, window_bounds = array<i64: 1, 64>}, {pipeline_mode = #tpu.pipeline_mode<synchronous>, transform_indices = @transform_5, window_bounds = array<i64: 64, 32>}, {pipeline_mode = #tpu.pipeline_mode<synchronous>, transform_indices = @transform_6, window_bounds = array<i64: 1, 32>}, {pipeline_mode = #tpu.pipeline_mode<synchronous>, transform_indices = @transform_7, window_bounds = array<i64: 8, 32>}, {pipeline_mode = #tpu.pipeline_mode<synchronous>, transform_indices = @transform_8, window_bounds = array<i64: 1, 1>}, {transform_indices = @transform_9, window_bounds = array<i64: 1, 256>}]} {
    %c0 = arith.constant 0 : index
    %c0_0 = arith.constant 0 : index
    %0 = vector.load %arg1[%c0, %c0_0] : memref<256x784xf32, #tpu.memory_space<vmem>>, vector<256x784xf32>
    %1 = arith.truncf %0 : vector<256x784xf32> to vector<256x784xbf16>
    %c0_1 = arith.constant 0 : index
    %c0_2 = arith.constant 0 : index
    %2 = vector.load %arg2[%c0_1, %c0_2] : memref<784x128xbf16, #tpu.memory_space<vmem>>, vector<784x128xbf16>
    %cst = arith.constant dense<0.000000e+00> : vector<256x128xf32>
    %3 = tpu.matmul %1, %2, %cst {dimension_numbers = #tpu.dot_dimension_numbers<[1], [0], [0], [1], [0, 0, 1, 1], [], []>} : vector<256x784xbf16>, vector<784x128xbf16>, vector<256x128xf32> -> vector<256x128xf32>
    %c0_3 = arith.constant 0 : index
    %c0_4 = arith.constant 0 : index
    %4 = vector.load %arg3[%c0_3, %c0_4] : memref<1x128xf32, #tpu.memory_space<vmem>>, vector<1x128xf32>
    %5 = vector.broadcast %4 : vector<1x128xf32> to vector<256x128xf32>
    %6 = arith.addf %3, %5 : vector<256x128xf32>
    %cst_5 = arith.constant 0.000000e+00 : f32
    %7 = vector.broadcast %cst_5 : f32 to vector<256x128xf32>
    %8 = arith.cmpf ogt, %6, %7 : vector<256x128xf32>
    %cst_6 = arith.constant 2.000000e-01 : f32
    %9 = vector.broadcast %cst_6 : f32 to vector<256x128xf32>
    %10 = arith.mulf %9, %6 : vector<256x128xf32>
    %11 = arith.select %8, %6, %10 : vector<256x128xi1>, vector<256x128xf32>
    %12 = arith.truncf %11 : vector<256x128xf32> to vector<256x128xbf16>
    %c0_7 = arith.constant 0 : index
    %c0_8 = arith.constant 0 : index
    %13 = vector.load %arg4[%c0_7, %c0_8] : memref<128x64xbf16, #tpu.memory_space<vmem>>, vector<128x64xbf16>
    %cst_9 = arith.constant dense<0.000000e+00> : vector<256x64xf32>
    %14 = tpu.matmul %12, %13, %cst_9 {dimension_numbers = #tpu.dot_dimension_numbers<[1], [0], [0], [1], [0, 0, 1, 1], [], []>} : vector<256x128xbf16>, vector<128x64xbf16>, vector<256x64xf32> -> vector<256x64xf32>
    %c0_10 = arith.constant 0 : index
    %c0_11 = arith.constant 0 : index
    %15 = vector.load %arg5[%c0_10, %c0_11] : memref<1x64xf32, #tpu.memory_space<vmem>>, vector<1x64xf32>
    %16 = vector.broadcast %15 : vector<1x64xf32> to vector<256x64xf32>
    %17 = arith.addf %14, %16 : vector<256x64xf32>
    %cst_12 = arith.constant 0.000000e+00 : f32
    %18 = vector.broadcast %cst_12 : f32 to vector<256x64xf32>
    %19 = arith.cmpf ogt, %17, %18 : vector<256x64xf32>
    %cst_13 = arith.constant 2.000000e-01 : f32
    %20 = vector.broadcast %cst_13 : f32 to vector<256x64xf32>
    %21 = arith.mulf %20, %17 : vector<256x64xf32>
    %22 = arith.select %19, %17, %21 : vector<256x64xi1>, vector<256x64xf32>
    %23 = arith.truncf %22 : vector<256x64xf32> to vector<256x64xbf16>
    %c0_14 = arith.constant 0 : index
    %c0_15 = arith.constant 0 : index
    %24 = vector.load %arg6[%c0_14, %c0_15] : memref<64x32xbf16, #tpu.memory_space<vmem>>, vector<64x32xbf16>
    %cst_16 = arith.constant dense<0.000000e+00> : vector<256x32xf32>
    %25 = tpu.matmul %23, %24, %cst_16 {dimension_numbers = #tpu.dot_dimension_numbers<[1], [0], [0], [1], [0, 0, 1, 1], [], []>} : vector<256x64xbf16>, vector<64x32xbf16>, vector<256x32xf32> -> vector<256x32xf32>
    %c0_17 = arith.constant 0 : index
    %c0_18 = arith.constant 0 : index
    %26 = vector.load %arg7[%c0_17, %c0_18] : memref<1x32xf32, #tpu.memory_space<vmem>>, vector<1x32xf32>
    %27 = vector.broadcast %26 : vector<1x32xf32> to vector<256x32xf32>
    %28 = arith.addf %25, %27 : vector<256x32xf32>
    %cst_19 = arith.constant 0.000000e+00 : f32
    %29 = vector.broadcast %cst_19 : f32 to vector<256x32xf32>
    %30 = arith.cmpf ogt, %28, %29 : vector<256x32xf32>
    %cst_20 = arith.constant 2.000000e-01 : f32
    %31 = vector.broadcast %cst_20 : f32 to vector<256x32xf32>
    %32 = arith.mulf %31, %28 : vector<256x32xf32>
    %33 = arith.select %30, %28, %32 : vector<256x32xi1>, vector<256x32xf32>
    %c0_21 = arith.constant 0 : index
    %c0_22 = arith.constant 0 : index
    %34 = vector.load %arg8[%c0_21, %c0_22] : memref<8x32xbf16, #tpu.memory_space<vmem>>, vector<8x32xbf16>
    %35 = arith.truncf %33 : vector<256x32xf32> to vector<256x32xbf16>
    %cst_23 = arith.constant dense<0.000000e+00> : vector<8x256xf32>
    %36 = tpu.matmul %34, %35, %cst_23 {dimension_numbers = #tpu.dot_dimension_numbers<[1], [1], [0], [0], [0, 0, 1, 0], [], []>} : vector<8x32xbf16>, vector<256x32xbf16>, vector<8x256xf32> -> vector<8x256xf32>
    %37 = vector.extract_strided_slice %36 {offsets = [0, 0], sizes = [1, 256], strides = [1, 1]} : vector<8x256xf32> to vector<1x256xf32>
    %c0_24 = arith.constant 0 : index
    %c0_25 = arith.constant 0 : index
    %38 = vector.load %arg9[%c0_24, %c0_25] : memref<1x1xf32, #tpu.memory_space<vmem>>, vector<1x1xf32>
    %39 = vector.broadcast %38 : vector<1x1xf32> to vector<1x256xf32>
    %40 = arith.addf %37, %39 : vector<1x256xf32>
    %c0_26 = arith.constant 0 : index
    %c0_27 = arith.constant 0 : index
    %41 = vector.load %arg10[%c0_26, %c0_27] : memref<1x256xf32, #tpu.memory_space<vmem>>, vector<1x256xf32>
    tpu.vector_store %arg10[%c0_26, %c0_27], %40 {strides = array<i32>} : memref<1x256xf32, #tpu.memory_space<vmem>>, vector<1x256xf32>,
    return
  }
  func.func @transform_0(%arg0: i32) -> (i32, i32) {
    %c0_i32 = arith.constant 0 : i32
    %c0_i32_0 = arith.constant 0 : i32
    return %arg0, %c0_i32 : i32, i32
  }
  func.func @transform_1(%arg0: i32) -> (i32, i32) {
    %c0_i32 = arith.constant 0 : i32
    %c0_i32_0 = arith.constant 0 : i32
    %c0_i32_1 = arith.constant 0 : i32
    return %c0_i32, %c0_i32_0 : i32, i32
  }
  func.func @transform_2(%arg0: i32) -> (i32, i32) {
    %c0_i32 = arith.constant 0 : i32
    %c0_i32_0 = arith.constant 0 : i32
    %c0_i32_1 = arith.constant 0 : i32
    return %c0_i32, %c0_i32_0 : i32, i32
  }
  func.func @transform_3(%arg0: i32) -> (i32, i32) {
    %c0_i32 = arith.constant 0 : i32
    %c0_i32_0 = arith.constant 0 : i32
    %c0_i32_1 = arith.constant 0 : i32
    return %c0_i32, %c0_i32_0 : i32, i32
  }
  func.func @transform_4(%arg0: i32) -> (i32, i32) {
    %c0_i32 = arith.constant 0 : i32
    %c0_i32_0 = arith.constant 0 : i32
    %c0_i32_1 = arith.constant 0 : i32
    return %c0_i32, %c0_i32_0 : i32, i32
  }
  func.func @transform_5(%arg0: i32) -> (i32, i32) {
    %c0_i32 = arith.constant 0 : i32
    %c0_i32_0 = arith.constant 0 : i32
    %c0_i32_1 = arith.constant 0 : i32
    return %c0_i32, %c0_i32_0 : i32, i32
  }
  func.func @transform_6(%arg0: i32) -> (i32, i32) {
    %c0_i32 = arith.constant 0 : i32
    %c0_i32_0 = arith.constant 0 : i32
    %c0_i32_1 = arith.constant 0 : i32
    return %c0_i32, %c0_i32_0 : i32, i32
  }
  func.func @transform_7(%arg0: i32) -> (i32, i32) {
    %c0_i32 = arith.constant 0 : i32
    %c0_i32_0 = arith.constant 0 : i32
    %c0_i32_1 = arith.constant 0 : i32
    return %c0_i32, %c0_i32_0 : i32, i32
  }
  func.func @transform_8(%arg0: i32) -> (i32, i32) {
    %c0_i32 = arith.constant 0 : i32
    %c0_i32_0 = arith.constant 0 : i32
    %c0_i32_1 = arith.constant 0 : i32
    return %c0_i32, %c0_i32_0 : i32, i32
  }
  func.func @transform_9(%arg0: i32) -> (i32, i32) {
    %c0_i32 = arith.constant 0 : i32
    %c0_i32_0 = arith.constant 0 : i32
    return %arg0, %c0_i32 : i32, i32
  }
}

</mosaic_0001>

<llo_original>
// kernel: tpu_custom_call.1
$region0: #{tpu_custom_call.1}
  #allocation0 [shape = 'u32[]', space=smem, size = 0x4, offset = 0x4, fixed_abs, tag = 'smem constant byte address 0x4 - core index']
  #allocation1 [shape = 'u32[72,128]{1,0:T(1,128)}', space=vmem, size = 0x9000, scoped, tag = 'internal scratch']
  #allocation2 [shape = 'f32[1,1]{1,0:T(1,128)S(1)}', space=vmem, size = 0x200, scoped, tag = 'scoped memory for tpu_custom_call.1']
  %s0 = inlined_call_operand.vmem [shape: f32[256,784], index: 0, kind: input, shape index: {}]
  %s1 = inlined_call_operand.vmem [shape: bf16[784,128], index: 1, kind: input, shape index: {}]
  %s2 = inlined_call_operand.vmem [shape: f32[1,128], index: 2, kind: input, shape index: {}]
  %s3 = inlined_call_operand.vmem [shape: bf16[128,64], index: 3, kind: input, shape index: {}]
  %s4 = inlined_call_operand.vmem [shape: f32[1,64], index: 4, kind: input, shape index: {}]
  %s5 = inlined_call_operand.vmem [shape: bf16[64,32], index: 5, kind: input, shape index: {}]
  %s6 = inlined_call_operand.vmem [shape: f32[1,32], index: 6, kind: input, shape index: {}]
  %s7 = inlined_call_operand.vmem [shape: bf16[8,32], index: 7, kind: input, shape index: {}]
  %s8 = inlined_call_operand.<no memory space> [shape: f32[1,1], index: 8, kind: input, shape index: {}]
  %s9 = inlined_call_operand.hbm [shape: f32[1,256], index: 9, kind: output, shape index: {}]
  %s10 = sld [smem:[#allocation0]]
  $region46: #{tpu_custom_call.1} parent=0
    _
  %s12 = ssub.s32 1, %s10
  %s13 = scalar_select 0, %s12, %s10
  %v14 = vstv %s8
  %15 = vst [vmem:[#allocation2] sm:$0x1] %v14
  $region1: #{tpu_custom_call.1} parent=0
    #allocation3 [shape = 'u8[1024]{0}', space=vmem, size = 0x400, scoped, tag = 'output window, operand 0, single buffered']
    #allocation4 [shape = 's32[1]{0}', space=sflag, size = 0x4, scoped, tag = 'scoped memory for tpu_custom_call.1']
    %16 = vsyncpa [#allocation4], 0
    // Predicated region
    $region2: #{tpu_custom_call.1} parent=1 // pred_check
      _
    $region3: #{tpu_custom_call.1} parent=1 // pred_check_branch
      %18 = sbr.rel (0) target = $region5
    $region4: #{tpu_custom_call.1} parent=1 // pred_region
      _
    $region5: #{tpu_custom_call.1} parent=1 // pred_fallthru
      _
    // Predicated region
    $region6: #{tpu_custom_call.1} parent=1 // pred_check
      _
    $region7: #{tpu_custom_call.1} parent=1 // pred_check_branch
      %20 = sbr.rel (0) target = $region9
    $region8: #{tpu_custom_call.1} parent=1 // pred_region
      _
    $region9: #{tpu_custom_call.1} parent=1 // pred_fallthru
      _
    // Predicated region
    $region10: #{tpu_custom_call.1} parent=1 // pred_check
      _
    $region11: #{tpu_custom_call.1} parent=1 // pred_check_branch
      %22 = sbr.rel (0) target = $region13
    $region12: #{tpu_custom_call.1} parent=1 // pred_region
      _
    $region13: #{tpu_custom_call.1} parent=1 // pred_fallthru
      _
    // Predicated region
    $region14: #{tpu_custom_call.1} parent=1 // pred_check
      _
    $region15: #{tpu_custom_call.1} parent=1 // pred_check_branch
      %24 = sbr.rel (0) target = $region17
    $region16: #{tpu_custom_call.1} parent=1 // pred_region
      _
    $region17: #{tpu_custom_call.1} parent=1 // pred_fallthru
      _
    // Predicated region
    $region18: #{tpu_custom_call.1} parent=1 // pred_check
      _
    $region19: #{tpu_custom_call.1} parent=1 // pred_check_branch
      %26 = sbr.rel (0) target = $region21
    $region20: #{tpu_custom_call.1} parent=1 // pred_region
      _
    $region21: #{tpu_custom_call.1} parent=1 // pred_fallthru
      _
    // Predicated region
    $region22: #{tpu_custom_call.1} parent=1 // pred_check
      _
    $region23: #{tpu_custom_call.1} parent=1 // pred_check_branch
      %28 = sbr.rel (0) target = $region25
    $region24: #{tpu_custom_call.1} parent=1 // pred_region
      _
    $region25: #{tpu_custom_call.1} parent=1 // pred_fallthru
      _
    // Predicated region
    $region26: #{tpu_custom_call.1} parent=1 // pred_check
      _
    $region27: #{tpu_custom_call.1} parent=1 // pred_check_branch
      %30 = sbr.rel (0) target = $region29
    $region28: #{tpu_custom_call.1} parent=1 // pred_region
      _
    $region29: #{tpu_custom_call.1} parent=1 // pred_fallthru
      _
    // Predicated region
    $region30: #{tpu_custom_call.1} parent=1 // pred_check
      _
    $region31: #{tpu_custom_call.1} parent=1 // pred_check_branch
      %32 = sbr.rel (0) target = $region33
    $region32: #{tpu_custom_call.1} parent=1 // pred_region
      _
    $region33: #{tpu_custom_call.1} parent=1 // pred_fallthru
      _
    // Predicated region
    $region34: #{tpu_custom_call.1} parent=1 // pred_check
      _
    $region35: #{tpu_custom_call.1} parent=1 // pred_check_branch
      %34 = sbr.rel (0) target = $region37
    $region36: #{tpu_custom_call.1} parent=1 // pred_region
      _
    $region37: #{tpu_custom_call.1} parent=1 // pred_fallthru
      _
    %v36 = vld [vmem:[%s0] sm:$0xff]
    %v37 = vld [vmem:[%s0 + $0x8] sm:$0xff]
    %v38 = vld [vmem:[%s0 + $0x10] sm:$0xff]
    %v39 = vld [vmem:[%s0 + $0x18] sm:$0xff]
    %v40 = vld [vmem:[%s0 + $0x20] sm:$0xff]
    %v41 = vld [vmem:[%s0 + $0x28] sm:$0xff]
    %v42 = vld [vmem:[%s0 + $0x30] sm:$0xff]
    %v43 = vld [vmem:[%s0 + $0x38] sm:$0xff]
    %v44 = vld [vmem:[%s0 + $0x40] sm:$0xff]
    %v45 = vld [vmem:[%s0 + $0x48] sm:$0xff]
    %v46 = vld [vmem:[%s0 + $0x50] sm:$0xff]
    %v47 = vld [vmem:[%s0 + $0x58] sm:$0xff]
    %v48 = vld [vmem:[%s0 + $0x60] sm:$0xff]
    %v49 = vld [vmem:[%s0 + $0x68] sm:$0xff]
    %v50 = vld [vmem:[%s0 + $0x70] sm:$0xff]
    %v51 = vld [vmem:[%s0 + $0x78] sm:$0xff]
    %v52 = vld [vmem:[%s0 + $0x80] sm:$0xff]
    %v53 = vld [vmem:[%s0 + $0x88] sm:$0xff]
    %v54 = vld [vmem:[%s0 + $0x90] sm:$0xff]
    %v55 = vld [vmem:[%s0 + $0x98] sm:$0xff]
    %v56 = vld [vmem:[%s0 + $0xa0] sm:$0xff]
    %v57 = vld [vmem:[%s0 + $0xa8] sm:$0xff]
    %v58 = vld [vmem:[%s0 + $0xb0] sm:$0xff]
    %v59 = vld [vmem:[%s0 + $0xb8] sm:$0xff]
    %v60 = vld [vmem:[%s0 + $0xc0] sm:$0xff]
    %v61 = vld [vmem:[%s0 + $0xc8] sm:$0xff]
    %v62 = vld [vmem:[%s0 + $0xd0] sm:$0xff]
    %v63 = vld [vmem:[%s0 + $0xd8] sm:$0xff]
    %v64 = vld [vmem:[%s0 + $0xe0] sm:$0xff]
    %v65 = vld [vmem:[%s0 + $0xe8] sm:$0xff]
    %v66 = vld [vmem:[%s0 + $0xf0] sm:$0xff]
    %v67 = vld [vmem:[%s0 + $0xf8] sm:$0xff]
    %v68 = vld [vmem:[%s0 + $0x100] sm:$0xff]
    %v69 = vld [vmem:[%s0 + $0x108] sm:$0xff]
    %v70 = vld [vmem:[%s0 + $0x110] sm:$0xff]
    %v71 = vld [vmem:[%s0 + $0x118] sm:$0xff]
    %v72 = vld [vmem:[%s0 + $0x120] sm:$0xff]
    %v73 = vld [vmem:[%s0 + $0x128] sm:$0xff]
    %v74 = vld [vmem:[%s0 + $0x130] sm:$0xff]
    %v75 = vld [vmem:[%s0 + $0x138] sm:$0xff]
    %v76 = vld [vmem:[%s0 + $0x140] sm:$0xff]
    %v77 = vld [vmem:[%s0 + $0x148] sm:$0xff]
    %v78 = vld [vmem:[%s0 + $0x150] sm:$0xff]
    %v79 = vld [vmem:[%s0 + $0x158] sm:$0xff]
    %v80 = vld [vmem:[%s0 + $0x160] sm:$0xff]
    %v81 = vld [vmem:[%s0 + $0x168] sm:$0xff]
    %v82 = vld [vmem:[%s0 + $0x170] sm:$0xff]
    %v83 = vld [vmem:[%s0 + $0x178] sm:$0xff]
    %v84 = vld [vmem:[%s0 + $0x180] sm:$0xff]
    %v85 = vld [vmem:[%s0 + $0x188] sm:$0xff]
    %v86 = vld [vmem:[%s0 + $0x190] sm:$0xff]
    %v87 = vld [vmem:[%s0 + $0x198] sm:$0xff]
    %v88 = vld [vmem:[%s0 + $0x1a0] sm:$0xff]
    %v89 = vld [vmem:[%s0 + $0x1a8] sm:$0xff]
    %v90 = vld [vmem:[%s0 + $0x1b0] sm:$0xff]
    %v91 = vld [vmem:[%s0 + $0x1b8] sm:$0xff]
    %v92 = vld [vmem:[%s0 + $0x1c0] sm:$0xff]
    %v93 = vld [vmem:[%s0 + $0x1c8] sm:$0xff]
    %v94 = vld [vmem:[%s0 + $0x1d0] sm:$0xff]
    %v95 = vld [vmem:[%s0 + $0x1d8] sm:$0xff]
    %v96 = vld [vmem:[%s0 + $0x1e0] sm:$0xff]
    %v97 = vld [vmem:[%s0 + $0x1e8] sm:$0xff]
    %v98 = vld [vmem:[%s0 + $0x1f0] sm:$0xff]
    %v99 = vld [vmem:[%s0 + $0x1f8] sm:$0xff]
    %v100 = vld [vmem:[%s0 + $0x200] sm:$0xff]
    %v101 = vld [vmem:[%s0 + $0x208] sm:$0xff]
    %v102 = vld [vmem:[%s0 + $0x210] sm:$0xff]
    %v103 = vld [vmem:[%s0 + $0x218] sm:$0xff]
    %v104 = vld [vmem:[%s0 + $0x220] sm:$0xff]
    %v105 = vld [vmem:[%s0 + $0x228] sm:$0xff]
    %v106 = vld [vmem:[%s0 + $0x230] sm:$0xff]
    %v107 = vld [vmem:[%s0 + $0x238] sm:$0xff]
    %v108 = vld [vmem:[%s0 + $0x240] sm:$0xff]
    %v109 = vld [vmem:[%s0 + $0x248] sm:$0xff]
    %v110 = vld [vmem:[%s0 + $0x250] sm:$0xff]
    %v111 = vld [vmem:[%s0 + $0x258] sm:$0xff]
    %v112 = vld [vmem:[%s0 + $0x260] sm:$0xff]
    %v113 = vld [vmem:[%s0 + $0x268] sm:$0xff]
    %v114 = vld [vmem:[%s0 + $0x270] sm:$0xff]
    %v115 = vld [vmem:[%s0 + $0x278] sm:$0xff]
    %v116 = vld [vmem:[%s0 + $0x280] sm:$0xff]
    %v117 = vld [vmem:[%s0 + $0x288] sm:$0xff]
    %v118 = vld [vmem:[%s0 + $0x290] sm:$0xff]
    %v119 = vld [vmem:[%s0 + $0x298] sm:$0xff]
    %v120 = vld [vmem:[%s0 + $0x2a0] sm:$0xff]
    %v121 = vld [vmem:[%s0 + $0x2a8] sm:$0xff]
    %v122 = vld [vmem:[%s0 + $0x2b0] sm:$0xff]
    %v123 = vld [vmem:[%s0 + $0x2b8] sm:$0xff]
    %v124 = vld [vmem:[%s0 + $0x2c0] sm:$0xff]
    %v125 = vld [vmem:[%s0 + $0x2c8] sm:$0xff]
    %v126 = vld [vmem:[%s0 + $0x2d0] sm:$0xff]
    %v127 = vld [vmem:[%s0 + $0x2d8] sm:$0xff]
    %v128 = vld [vmem:[%s0 + $0x2e0] sm:$0xff]
    %v129 = vld [vmem:[%s0 + $0x2e8] sm:$0xff]
    %v130 = vld [vmem:[%s0 + $0x2f0] sm:$0xff]
    %v131 = vld [vmem:[%s0 + $0x2f8] sm:$0xff]
    %v132 = vld [vmem:[%s0 + $0x300] sm:$0xff]
    %v133 = vld [vmem:[%s0 + $0x308] sm:$0xff]
    %v134 = vld [vmem:[%s0 + $0x310] sm:$0xff]
    %v135 = vld [vmem:[%s0 + $0x318] sm:$0xff]
    %v136 = vld [vmem:[%s0 + $0x320] sm:$0xff]
    %v137 = vld [vmem:[%s0 + $0x328] sm:$0xff]
    %v138 = vld [vmem:[%s0 + $0x330] sm:$0xff]
    %v139 = vld [vmem:[%s0 + $0x338] sm:$0xff]
    %v140 = vld [vmem:[%s0 + $0x340] sm:$0xff]
    %v141 = vld [vmem:[%s0 + $0x348] sm:$0xff]
    %v142 = vld [vmem:[%s0 + $0x350] sm:$0xff]
    %v143 = vld [vmem:[%s0 + $0x358] sm:$0xff]
    %v144 = vld [vmem:[%s0 + $0x360] sm:$0xff]
    %v145 = vld [vmem:[%s0 + $0x368] sm:$0xff]
    %v146 = vld [vmem:[%s0 + $0x370] sm:$0xff]
    %v147 = vld [vmem:[%s0 + $0x378] sm:$0xff]
    %v148 = vld [vmem:[%s0 + $0x380] sm:$0xff]
    %v149 = vld [vmem:[%s0 + $0x388] sm:$0xff]
    %v150 = vld [vmem:[%s0 + $0x390] sm:$0xff]
    %v151 = vld [vmem:[%s0 + $0x398] sm:$0xff]
    %v152 = vld [vmem:[%s0 + $0x3a0] sm:$0xff]
    %v153 = vld [vmem:[%s0 + $0x3a8] sm:$0xff]
    %v154 = vld [vmem:[%s0 + $0x3b0] sm:$0xff]
    %v155 = vld [vmem:[%s0 + $0x3b8] sm:$0xff]
    %v156 = vld [vmem:[%s0 + $0x3c0] sm:$0xff]
    %v157 = vld [vmem:[%s0 + $0x3c8] sm:$0xff]
    %v158 = vld [vmem:[%s0 + $0x3d0] sm:$0xff]
    %v159 = vld [vmem:[%s0 + $0x3d8] sm:$0xff]
    %v160 = vld [vmem:[%s0 + $0x3e0] sm:$0xff]
    %v161 = vld [vmem:[%s0 + $0x3e8] sm:$0xff]
    %v162 = vld [vmem:[%s0 + $0x3f0] sm:$0xff]
    %v163 = vld [vmem:[%s0 + $0x3f8] sm:$0xff]
    %v164 = vld [vmem:[%s0 + $0x400] sm:$0xff]
    %v165 = vld [vmem:[%s0 + $0x408] sm:$0xff]
    %v166 = vld [vmem:[%s0 + $0x410] sm:$0xff]
    %v167 = vld [vmem:[%s0 + $0x418] sm:$0xff]
    %v168 = vld [vmem:[%s0 + $0x420] sm:$0xff]
    %v169 = vld [vmem:[%s0 + $0x428] sm:$0xff]
    %v170 = vld [vmem:[%s0 + $0x430] sm:$0xff]
    %v171 = vld [vmem:[%s0 + $0x438] sm:$0xff]
    %v172 = vld [vmem:[%s0 + $0x440] sm:$0xff]
    %v173 = vld [vmem:[%s0 + $0x448] sm:$0xff]
    %v174 = vld [vmem:[%s0 + $0x450] sm:$0xff]
    %v175 = vld [vmem:[%s0 + $0x458] sm:$0xff]
    %v176 = vld [vmem:[%s0 + $0x460] sm:$0xff]
    %v177 = vld [vmem:[%s0 + $0x468] sm:$0xff]
    %v178 = vld [vmem:[%s0 + $0x470] sm:$0xff]
    %v179 = vld [vmem:[%s0 + $0x478] sm:$0xff]
    %v180 = vld [vmem:[%s0 + $0x480] sm:$0xff]
    %v181 = vld [vmem:[%s0 + $0x488] sm:$0xff]
    %v182 = vld [vmem:[%s0 + $0x490] sm:$0xff]
    %v183 = vld [vmem:[%s0 + $0x498] sm:$0xff]
    %v184 = vld [vmem:[%s0 + $0x4a0] sm:$0xff]
    %v185 = vld [vmem:[%s0 + $0x4a8] sm:$0xff]
    %v186 = vld [vmem:[%s0 + $0x4b0] sm:$0xff]
    %v187 = vld [vmem:[%s0 + $0x4b8] sm:$0xff]
    %v188 = vld [vmem:[%s0 + $0x4c0] sm:$0xff]
    %v189 = vld [vmem:[%s0 + $0x4c8] sm:$0xff]
    %v190 = vld [vmem:[%s0 + $0x4d0] sm:$0xff]
    %v191 = vld [vmem:[%s0 + $0x4d8] sm:$0xff]
    %v192 = vld [vmem:[%s0 + $0x4e0] sm:$0xff]
    %v193 = vld [vmem:[%s0 + $0x4e8] sm:$0xff]
    %v194 = vld [vmem:[%s0 + $0x4f0] sm:$0xff]
    %v195 = vld [vmem:[%s0 + $0x4f8] sm:$0xff]
    %v196 = vld [vmem:[%s0 + $0x500] sm:$0xff]
    %v197 = vld [vmem:[%s0 + $0x508] sm:$0xff]
    %v198 = vld [vmem:[%s0 + $0x510] sm:$0xff]
    %v199 = vld [vmem:[%s0 + $0x518] sm:$0xff]
    %v200 = vld [vmem:[%s0 + $0x520] sm:$0xff]
    %v201 = vld [vmem:[%s0 + $0x528] sm:$0xff]
    %v202 = vld [vmem:[%s0 + $0x530] sm:$0xff]
    %v203 = vld [vmem:[%s0 + $0x538] sm:$0xff]
    %v204 = vld [vmem:[%s0 + $0x540] sm:$0xff]
    %v205 = vld [vmem:[%s0 + $0x548] sm:$0xff]
    %v206 = vld [vmem:[%s0 + $0x550] sm:$0xff]
    %v207 = vld [vmem:[%s0 + $0x558] sm:$0xff]
    %v208 = vld [vmem:[%s0 + $0x560] sm:$0xff]
    %v209 = vld [vmem:[%s0 + $0x568] sm:$0xff]
    %v210 = vld [vmem:[%s0 + $0x570] sm:$0xff]
    %v211 = vld [vmem:[%s0 + $0x578] sm:$0xff]
    %v212 = vld [vmem:[%s0 + $0x580] sm:$0xff]
    %v213 = vld [vmem:[%s0 + $0x588] sm:$0xff]
    %v214 = vld [vmem:[%s0 + $0x590] sm:$0xff]
    %v215 = vld [vmem:[%s0 + $0x598] sm:$0xff]
    %v216 = vld [vmem:[%s0 + $0x5a0] sm:$0xff]
    %v217 = vld [vmem:[%s0 + $0x5a8] sm:$0xff]
    %v218 = vld [vmem:[%s0 + $0x5b0] sm:$0xff]
    %v219 = vld [vmem:[%s0 + $0x5b8] sm:$0xff]
    %v220 = vld [vmem:[%s0 + $0x5c0] sm:$0xff]
    %v221 = vld [vmem:[%s0 + $0x5c8] sm:$0xff]
    %v222 = vld [vmem:[%s0 + $0x5d0] sm:$0xff]
    %v223 = vld [vmem:[%s0 + $0x5d8] sm:$0xff]
    %v224 = vld [vmem:[%s0 + $0x5e0] sm:$0xff]
    %v225 = vld [vmem:[%s0 + $0x5e8] sm:$0xff]
    %v226 = vld [vmem:[%s0 + $0x5f0] sm:$0xff]
    %v227 = vld [vmem:[%s0 + $0x5f8] sm:$0xff]
    %v228 = vld [vmem:[%s0 + $0x600] sm:$0xff]
    %v229 = vld [vmem:[%s0 + $0x608] sm:$0xff]
    %v230 = vld [vmem:[%s0 + $0x610] sm:$0xff]
    %v231 = vld [vmem:[%s0 + $0x618] sm:$0xff]
    %v232 = vld [vmem:[%s0 + $0x620] sm:$0xff]
    %v233 = vld [vmem:[%s0 + $0x628] sm:$0xff]
    %v234 = vld [vmem:[%s0 + $0x630] sm:$0xff]
    %v235 = vld [vmem:[%s0 + $0x638] sm:$0xff]
    %v236 = vld [vmem:[%s0 + $0x640] sm:$0xff]
    %v237 = vld [vmem:[%s0 + $0x648] sm:$0xff]
    %v238 = vld [vmem:[%s0 + $0x650] sm:$0xff]
    %v239 = vld [vmem:[%s0 + $0x658] sm:$0xff]
    %v240 = vld [vmem:[%s0 + $0x660] sm:$0xff]
    %v241 = vld [vmem:[%s0 + $0x668] sm:$0xff]
    %v242 = vld [vmem:[%s0 + $0x670] sm:$0xff]
    %v243 = vld [vmem:[%s0 + $0x678] sm:$0xff]
    %v244 = vld [vmem:[%s0 + $0x680] sm:$0xff]
    %v245 = vld [vmem:[%s0 + $0x688] sm:$0xff]
    %v246 = vld [vmem:[%s0 + $0x690] sm:$0xff]
    %v247 = vld [vmem:[%s0 + $0x698] sm:$0xff]
    %v248 = vld [vmem:[%s0 + $0x6a0] sm:$0xff]
    %v249 = vld [vmem:[%s0 + $0x6a8] sm:$0xff]
    %v250 = vld [vmem:[%s0 + $0x6b0] sm:$0xff]
    %v251 = vld [vmem:[%s0 + $0x6b8] sm:$0xff]
    %v252 = vld [vmem:[%s0 + $0x6c0] sm:$0xff]
    %v253 = vld [vmem:[%s0 + $0x6c8] sm:$0xff]
    %v254 = vld [vmem:[%s0 + $0x6d0] sm:$0xff]
    %v255 = vld [vmem:[%s0 + $0x6d8] sm:$0xff]
    %v256 = vld [vmem:[%s0 + $0x6e0] sm:$0xff]
    %v257 = vld [vmem:[%s0 + $0x6e8] sm:$0xff]
    %v258 = vld [vmem:[%s0 + $0x6f0] sm:$0xff]
    %v259 = vld [vmem:[%s0 + $0x6f8] sm:$0xff]
    %v260 = vpack.c.bf16 %v43, %v36
    %v261 = vpack.c.bf16 %v44, %v37
    %v262 = vpack.c.bf16 %v45, %v38
    %v263 = vpack.c.bf16 %v46, %v39
    %v264 = vpack.c.bf16 %v47, %v40
    %v265 = vpack.c.bf16 %v48, %v41
    %v266 = vpack.c.bf16 %v49, %v42
    %v267 = vpack.c.bf16 %v57, %v50
    %v268 = vpack.c.bf16 %v58, %v51
    %v269 = vpack.c.bf16 %v59, %v52
    %v270 = vpack.c.bf16 %v60, %v53
    %v271 = vpack.c.bf16 %v61, %v54
    %v272 = vpack.c.bf16 %v62, %v55
    %v273 = vpack.c.bf16 %v63, %v56
    %v274 = vpack.c.bf16 %v71, %v64
    %v275 = vpack.c.bf16 %v72, %v65
    %v276 = vpack.c.bf16 %v73, %v66
    %v277 = vpack.c.bf16 %v74, %v67
    %v278 = vpack.c.bf16 %v75, %v68
    %v279 = vpack.c.bf16 %v76, %v69
    %v280 = vpack.c.bf16 %v77, %v70
    %v281 = vpack.c.bf16 %v85, %v78
    %v282 = vpack.c.bf16 %v86, %v79
    %v283 = vpack.c.bf16 %v87, %v80
    %v284 = vpack.c.bf16 %v88, %v81
    %v285 = vpack.c.bf16 %v89, %v82
    %v286 = vpack.c.bf16 %v90, %v83
    %v287 = vpack.c.bf16 %v91, %v84
    %v288 = vpack.c.bf16 %v99, %v92
    %v289 = vpack.c.bf16 %v100, %v93
    %v290 = vpack.c.bf16 %v101, %v94
    %v291 = vpack.c.bf16 %v102, %v95
    %v292 = vpack.c.bf16 %v103, %v96
    %v293 = vpack.c.bf16 %v104, %v97
    %v294 = vpack.c.bf16 %v105, %v98
    %v295 = vpack.c.bf16 %v113, %v106
    %v296 = vpack.c.bf16 %v114, %v107
    %v297 = vpack.c.bf16 %v115, %v108
    %v298 = vpack.c.bf16 %v116, %v109
    %v299 = vpack.c.bf16 %v117, %v110
    %v300 = vpack.c.bf16 %v118, %v111
    %v301 = vpack.c.bf16 %v119, %v112
    %v302 = vpack.c.bf16 %v127, %v120
    %v303 = vpack.c.bf16 %v128, %v121
    %v304 = vpack.c.bf16 %v129, %v122
    %v305 = vpack.c.bf16 %v130, %v123
    %v306 = vpack.c.bf16 %v131, %v124
    %v307 = vpack.c.bf16 %v132, %v125
    %v308 = vpack.c.bf16 %v133, %v126
    %v309 = vpack.c.bf16 %v141, %v134
    %v310 = vpack.c.bf16 %v142, %v135
    %v311 = vpack.c.bf16 %v143, %v136
    %v312 = vpack.c.bf16 %v144, %v137
    %v313 = vpack.c.bf16 %v145, %v138
    %v314 = vpack.c.bf16 %v146, %v139
    %v315 = vpack.c.bf16 %v147, %v140
    %v316 = vpack.c.bf16 %v155, %v148
    %v317 = vpack.c.bf16 %v156, %v149
    %v318 = vpack.c.bf16 %v157, %v150
    %v319 = vpack.c.bf16 %v158, %v151
    %v320 = vpack.c.bf16 %v159, %v152
    %v321 = vpack.c.bf16 %v160, %v153
    %v322 = vpack.c.bf16 %v161, %v154
    %v323 = vpack.c.bf16 %v169, %v162
    %v324 = vpack.c.bf16 %v170, %v163
    %v325 = vpack.c.bf16 %v171, %v164
    %v326 = vpack.c.bf16 %v172, %v165
    %v327 = vpack.c.bf16 %v173, %v166
    %v328 = vpack.c.bf16 %v174, %v167
    %v329 = vpack.c.bf16 %v175, %v168
    %v330 = vpack.c.bf16 %v183, %v176
    %v331 = vpack.c.bf16 %v184, %v177
    %v332 = vpack.c.bf16 %v185, %v178
    %v333 = vpack.c.bf16 %v186, %v179
    %v334 = vpack.c.bf16 %v187, %v180
    %v335 = vpack.c.bf16 %v188, %v181
    %v336 = vpack.c.bf16 %v189, %v182
    %v337 = vpack.c.bf16 %v197, %v190
    %v338 = vpack.c.bf16 %v198, %v191
    %v339 = vpack.c.bf16 %v199, %v192
    %v340 = vpack.c.bf16 %v200, %v193
    %v341 = vpack.c.bf16 %v201, %v194
    %v342 = vpack.c.bf16 %v202, %v195
    %v343 = vpack.c.bf16 %v203, %v196
    %v344 = vpack.c.bf16 %v211, %v204
    %v345 = vpack.c.bf16 %v212, %v205
    %v346 = vpack.c.bf16 %v213, %v206
    %v347 = vpack.c.bf16 %v214, %v207
    %v348 = vpack.c.bf16 %v215, %v208
    %v349 = vpack.c.bf16 %v216, %v209
    %v350 = vpack.c.bf16 %v217, %v210
    %v351 = vpack.c.bf16 %v225, %v218
    %v352 = vpack.c.bf16 %v226, %v219
    %v353 = vpack.c.bf16 %v227, %v220
    %v354 = vpack.c.bf16 %v228, %v221
    %v355 = vpack.c.bf16 %v229, %v222
    %v356 = vpack.c.bf16 %v230, %v223
    %v357 = vpack.c.bf16 %v231, %v224
    %v358 = vpack.c.bf16 %v239, %v232
    %v359 = vpack.c.bf16 %v240, %v233
    %v360 = vpack.c.bf16 %v241, %v234
    %v361 = vpack.c.bf16 %v242, %v235
    %v362 = vpack.c.bf16 %v243, %v236
    %v363 = vpack.c.bf16 %v244, %v237
    %v364 = vpack.c.bf16 %v245, %v238
    %v365 = vpack.c.bf16 %v253, %v246
    %v366 = vpack.c.bf16 %v254, %v247
    %v367 = vpack.c.bf16 %v255, %v248
    %v368 = vpack.c.bf16 %v256, %v249
    %v369 = vpack.c.bf16 %v257, %v250
    %v370 = vpack.c.bf16 %v258, %v251
    %v371 = vpack.c.bf16 %v259, %v252
    %v372 = vld [vmem:[%s1] sm:$0xf]
    %v373 = vld [vmem:[%s1 + $0x4] sm:$0xf]
    %v374 = vld [vmem:[%s1 + $0x8] sm:$0xf]
    %v375 = vld [vmem:[%s1 + $0xc] sm:$0xf]
    %v376 = vld [vmem:[%s1 + $0x10] sm:$0xf]
    %v377 = vld [vmem:[%s1 + $0x14] sm:$0xf]
    %v378 = vld [vmem:[%s1 + $0x18] sm:$0xf]
    %v379 = vld [vmem:[%s1 + $0x1c] sm:$0xf]
    %v380 = vld [vmem:[%s1 + $0x20] sm:$0xf]
    %v381 = vld [vmem:[%s1 + $0x24] sm:$0xf]
    %v382 = vld [vmem:[%s1 + $0x28] sm:$0xf]
    %v383 = vld [vmem:[%s1 + $0x2c] sm:$0xf]
    %v384 = vld [vmem:[%s1 + $0x30] sm:$0xf]
    %v385 = vld [vmem:[%s1 + $0x34] sm:$0xf]
    %v386 = vld [vmem:[%s1 + $0x38] sm:$0xf]
    %v387 = vld [vmem:[%s1 + $0x3c] sm:$0xf]
    %v388 = vld [vmem:[%s1 + $0x40] sm:$0xf]
    %v389 = vld [vmem:[%s1 + $0x44] sm:$0xf]
    %v390 = vld [vmem:[%s1 + $0x48] sm:$0xf]
    %v391 = vld [vmem:[%s1 + $0x4c] sm:$0xf]
    %v392 = vld [vmem:[%s1 + $0x50] sm:$0xf]
    %v393 = vld [vmem:[%s1 + $0x54] sm:$0xf]
    %v394 = vld [vmem:[%s1 + $0x58] sm:$0xf]
    %v395 = vld [vmem:[%s1 + $0x5c] sm:$0xf]
    %v396 = vld [vmem:[%s1 + $0x60] sm:$0xf]
    %v397 = vld [vmem:[%s1 + $0x64] sm:$0xf]
    %v398 = vld [vmem:[%s1 + $0x68] sm:$0xf]
    %v399 = vld [vmem:[%s1 + $0x6c] sm:$0xf]
    %v400 = vld [vmem:[%s1 + $0x70] sm:$0xf]
    %v401 = vld [vmem:[%s1 + $0x74] sm:$0xf]
    %v402 = vld [vmem:[%s1 + $0x78] sm:$0xf]
    %v403 = vld [vmem:[%s1 + $0x7c] sm:$0xf]
    %v404 = vld [vmem:[%s1 + $0x80] sm:$0xf]
    %v405 = vld [vmem:[%s1 + $0x84] sm:$0xf]
    %v406 = vld [vmem:[%s1 + $0x88] sm:$0xf]
    %v407 = vld [vmem:[%s1 + $0x8c] sm:$0xf]
    %v408 = vld [vmem:[%s1 + $0x90] sm:$0xf]
    %v409 = vld [vmem:[%s1 + $0x94] sm:$0xf]
    %v410 = vld [vmem:[%s1 + $0x98] sm:$0xf]
    %v411 = vld [vmem:[%s1 + $0x9c] sm:$0xf]
    %v412 = vld [vmem:[%s1 + $0xa0] sm:$0xf]
    %v413 = vld [vmem:[%s1 + $0xa4] sm:$0xf]
    %v414 = vld [vmem:[%s1 + $0xa8] sm:$0xf]
    %v415 = vld [vmem:[%s1 + $0xac] sm:$0xf]
    %v416 = vld [vmem:[%s1 + $0xb0] sm:$0xf]
    %v417 = vld [vmem:[%s1 + $0xb4] sm:$0xf]
    %v418 = vld [vmem:[%s1 + $0xb8] sm:$0xf]
    %v419 = vld [vmem:[%s1 + $0xbc] sm:$0xf]
    %v420 = vld [vmem:[%s1 + $0xc0] sm:$0xf]
    %v421 = vld [vmem:[%s1 + $0xc4] sm:$0xf]
    %v422 = vld [vmem:[%s1 + $0xc8] sm:$0xf]
    %v423 = vld [vmem:[%s1 + $0xcc] sm:$0xf]
    %v424 = vld [vmem:[%s1 + $0xd0] sm:$0xf]
    %v425 = vld [vmem:[%s1 + $0xd4] sm:$0xf]
    %v426 = vld [vmem:[%s1 + $0xd8] sm:$0xf]
    %v427 = vld [vmem:[%s1 + $0xdc] sm:$0xf]
    %v428 = vld [vmem:[%s1 + $0xe0] sm:$0xf]
    %v429 = vld [vmem:[%s1 + $0xe4] sm:$0xf]
    %v430 = vld [vmem:[%s1 + $0xe8] sm:$0xf]
    %v431 = vld [vmem:[%s1 + $0xec] sm:$0xf]
    %v432 = vld [vmem:[%s1 + $0xf0] sm:$0xf]
    %v433 = vld [vmem:[%s1 + $0xf4] sm:$0xf]
    %v434 = vld [vmem:[%s1 + $0xf8] sm:$0xf]
    %v435 = vld [vmem:[%s1 + $0xfc] sm:$0xf]
    %v436 = vld [vmem:[%s1 + $0x100] sm:$0xf]
    %v437 = vld [vmem:[%s1 + $0x104] sm:$0xf]
    %v438 = vld [vmem:[%s1 + $0x108] sm:$0xf]
    %v439 = vld [vmem:[%s1 + $0x10c] sm:$0xf]
    %v440 = vld [vmem:[%s1 + $0x110] sm:$0xf]
    %v441 = vld [vmem:[%s1 + $0x114] sm:$0xf]
    %v442 = vld [vmem:[%s1 + $0x118] sm:$0xf]
    %v443 = vld [vmem:[%s1 + $0x11c] sm:$0xf]
    %v444 = vld [vmem:[%s1 + $0x120] sm:$0xf]
    %v445 = vld [vmem:[%s1 + $0x124] sm:$0xf]
    %v446 = vld [vmem:[%s1 + $0x128] sm:$0xf]
    %v447 = vld [vmem:[%s1 + $0x12c] sm:$0xf]
    %v448 = vld [vmem:[%s1 + $0x130] sm:$0xf]
    %v449 = vld [vmem:[%s1 + $0x134] sm:$0xf]
    %v450 = vld [vmem:[%s1 + $0x138] sm:$0xf]
    %v451 = vld [vmem:[%s1 + $0x13c] sm:$0xf]
    %v452 = vld [vmem:[%s1 + $0x140] sm:$0xf]
    %v453 = vld [vmem:[%s1 + $0x144] sm:$0xf]
    %v454 = vld [vmem:[%s1 + $0x148] sm:$0xf]
    %v455 = vld [vmem:[%s1 + $0x14c] sm:$0xf]
    %v456 = vld [vmem:[%s1 + $0x150] sm:$0xf]
    %v457 = vld [vmem:[%s1 + $0x154] sm:$0xf]
    %v458 = vld [vmem:[%s1 + $0x158] sm:$0xf]
    %v459 = vld [vmem:[%s1 + $0x15c] sm:$0xf]
    %v460 = vld [vmem:[%s1 + $0x160] sm:$0xf]
    %v461 = vld [vmem:[%s1 + $0x164] sm:$0xf]
    %v462 = vld [vmem:[%s1 + $0x168] sm:$0xf]
    %v463 = vld [vmem:[%s1 + $0x16c] sm:$0xf]
    %v464 = vld [vmem:[%s1 + $0x170] sm:$0xf]
    %v465 = vld [vmem:[%s1 + $0x174] sm:$0xf]
    %v466 = vld [vmem:[%s1 + $0x178] sm:$0xf]
    %v467 = vld [vmem:[%s1 + $0x17c] sm:$0xf]
    %v468 = vld [vmem:[%s1 + $0x180] sm:$0xf]
    %v469 = vld [vmem:[%s1 + $0x184] sm:$0xf]
    %v470 = vld [vmem:[%s2] sm:$0x1]
    %v472 = vperm.slane %v470, 0
    %v572 = vunpack.c.l.b16 %v372
    %v573 = vunpack.c.l.b16 %v373
    %v574 = vunpack.c.l.b16 %v374
    %v575 = vunpack.c.l.b16 %v375
    %v576 = vunpack.c.l.b16 %v376
    %v577 = vunpack.c.l.b16 %v377
    %v578 = vunpack.c.l.b16 %v378
    %v579 = vunpack.c.l.b16 %v379
    %v580 = vunpack.c.l.b16 %v380
    %v581 = vunpack.c.l.b16 %v381
    %v582 = vunpack.c.l.b16 %v382
    %v583 = vunpack.c.l.b16 %v383
    %v584 = vunpack.c.l.b16 %v384
    %v585 = vunpack.c.l.b16 %v385
    %v586 = vunpack.c.l.b16 %v386
    %v587 = vunpack.c.l.b16 %v387
    %v588 = vunpack.c.l.b16 %v388
    %v589 = vunpack.c.l.b16 %v389
    %v590 = vunpack.c.l.b16 %v390
    %v591 = vunpack.c.l.b16 %v391
    %v592 = vunpack.c.l.b16 %v392
    %v593 = vunpack.c.l.b16 %v393
    %v594 = vunpack.c.l.b16 %v394
    %v595 = vunpack.c.l.b16 %v395
    %v596 = vunpack.c.l.b16 %v396
    %v597 = vunpack.c.l.b16 %v397
    %v598 = vunpack.c.l.b16 %v398
    %v599 = vunpack.c.l.b16 %v399
    %v600 = vunpack.c.l.b16 %v400
    %v601 = vunpack.c.l.b16 %v401
    %v602 = vunpack.c.l.b16 %v402
    %v603 = vunpack.c.l.b16 %v403
    %v604 = vunpack.c.l.b16 %v404
    %v605 = vunpack.c.l.b16 %v405
    %v606 = vunpack.c.l.b16 %v406
    %v607 = vunpack.c.l.b16 %v407
    %v608 = vunpack.c.l.b16 %v408
    %v609 = vunpack.c.l.b16 %v409
    %v610 = vunpack.c.l.b16 %v410
    %v611 = vunpack.c.l.b16 %v411
    %v612 = vunpack.c.l.b16 %v412
    %v613 = vunpack.c.l.b16 %v413
    %v614 = vunpack.c.l.b16 %v414
    %v615 = vunpack.c.l.b16 %v415
    %v616 = vunpack.c.l.b16 %v416
    %v617 = vunpack.c.l.b16 %v417
    %v618 = vunpack.c.l.b16 %v418
    %v619 = vunpack.c.l.b16 %v419
    %v620 = vunpack.c.l.b16 %v420
    %v621 = vunpack.c.l.b16 %v421
    %v622 = vunpack.c.l.b16 %v422
    %v623 = vunpack.c.l.b16 %v423
    %v624 = vunpack.c.l.b16 %v424
    %v625 = vunpack.c.l.b16 %v425
    %v626 = vunpack.c.l.b16 %v426
    %v627 = vunpack.c.l.b16 %v427
    %v628 = vunpack.c.l.b16 %v428
    %v629 = vunpack.c.l.b16 %v429
    %v630 = vunpack.c.l.b16 %v430
    %v631 = vunpack.c.l.b16 %v431
    %v632 = vunpack.c.l.b16 %v432
    %v633 = vunpack.c.l.b16 %v433
    %v634 = vunpack.c.l.b16 %v434
    %v635 = vunpack.c.l.b16 %v435
    %v636 = vunpack.c.l.b16 %v436
    %v637 = vunpack.c.l.b16 %v437
    %v638 = vunpack.c.l.b16 %v438
    %v639 = vunpack.c.l.b16 %v439
    %v640 = vunpack.c.l.b16 %v440
    %v641 = vunpack.c.l.b16 %v441
    %v642 = vunpack.c.l.b16 %v442
    %v643 = vunpack.c.l.b16 %v443
    %v644 = vunpack.c.l.b16 %v444
    %v645 = vunpack.c.l.b16 %v445
    %v646 = vunpack.c.l.b16 %v446
    %v647 = vunpack.c.l.b16 %v447
    %v648 = vunpack.c.l.b16 %v448
    %v649 = vunpack.c.l.b16 %v449
    %v650 = vunpack.c.l.b16 %v450
    %v651 = vunpack.c.l.b16 %v451
    %v652 = vunpack.c.l.b16 %v452
    %v653 = vunpack.c.l.b16 %v453
    %v654 = vunpack.c.l.b16 %v454
    %v655 = vunpack.c.l.b16 %v455
    %v656 = vunpack.c.l.b16 %v456
    %v657 = vunpack.c.l.b16 %v457
    %v658 = vunpack.c.l.b16 %v458
    %v659 = vunpack.c.l.b16 %v459
    %v660 = vunpack.c.l.b16 %v460
    %v661 = vunpack.c.l.b16 %v461
    %v662 = vunpack.c.l.b16 %v462
    %v663 = vunpack.c.l.b16 %v463
    %v664 = vunpack.c.l.b16 %v464
    %v665 = vunpack.c.l.b16 %v465
    %v666 = vunpack.c.l.b16 %v466
    %v667 = vunpack.c.l.b16 %v467
    %v668 = vunpack.c.l.b16 %v468
    %v669 = vunpack.c.l.b16 %v469
    %v670 = vpack.c.b16 %v573, %v572
    %v671 = vpack.c.b16 %v575, %v574
    %v672 = vpack.c.b16 %v577, %v576
    %v673 = vpack.c.b16 %v579, %v578
    %v674 = vpack.c.b16 %v581, %v580
    %v675 = vpack.c.b16 %v583, %v582
    %v676 = vpack.c.b16 %v585, %v584
    %v677 = vpack.c.b16 %v587, %v586
    %v678 = vpack.c.b16 %v589, %v588
    %v679 = vpack.c.b16 %v591, %v590
    %v680 = vpack.c.b16 %v593, %v592
    %v681 = vpack.c.b16 %v595, %v594
    %v682 = vpack.c.b16 %v597, %v596
    %v683 = vpack.c.b16 %v599, %v598
    %v684 = vpack.c.b16 %v601, %v600
    %v685 = vpack.c.b16 %v603, %v602
    %v686 = vpack.c.b16 %v605, %v604
    %v687 = vpack.c.b16 %v607, %v606
    %v688 = vpack.c.b16 %v609, %v608
    %v689 = vpack.c.b16 %v611, %v610
    %v690 = vpack.c.b16 %v613, %v612
    %v691 = vpack.c.b16 %v615, %v614
    %v692 = vpack.c.b16 %v617, %v616
    %v693 = vpack.c.b16 %v619, %v618
    %v694 = vpack.c.b16 %v621, %v620
    %v695 = vpack.c.b16 %v623, %v622
    %v696 = vpack.c.b16 %v625, %v624
    %v697 = vpack.c.b16 %v627, %v626
    %v698 = vpack.c.b16 %v629, %v628
    %v699 = vpack.c.b16 %v631, %v630
    %v700 = vpack.c.b16 %v633, %v632
    %v701 = vpack.c.b16 %v635, %v634
    %v702 = vpack.c.b16 %v637, %v636
    %v703 = vpack.c.b16 %v639, %v638
    %v704 = vpack.c.b16 %v641, %v640
    %v705 = vpack.c.b16 %v643, %v642
    %v706 = vpack.c.b16 %v645, %v644
    %v707 = vpack.c.b16 %v647, %v646
    %v708 = vpack.c.b16 %v649, %v648
    %v709 = vpack.c.b16 %v651, %v650
    %v710 = vpack.c.b16 %v653, %v652
    %v711 = vpack.c.b16 %v655, %v654
    %v712 = vpack.c.b16 %v657, %v656
    %v713 = vpack.c.b16 %v659, %v658
    %v714 = vpack.c.b16 %v661, %v660
    %v715 = vpack.c.b16 %v663, %v662
    %v716 = vpack.c.b16 %v665, %v664
    %v717 = vpack.c.b16 %v667, %v666
    %v718 = vpack.c.b16 %v669, %v668
    %vm768 = vcmask 130048
    %v770 = vsel %vm768, %v266, 0
    %v773 = vsel %vm768, %v273, 0
    %v776 = vsel %vm768, %v280, 0
    %v779 = vsel %vm768, %v287, 0
    %v782 = vsel %vm768, %v294, 0
    %v785 = vsel %vm768, %v301, 0
    %v788 = vsel %vm768, %v308, 0
    %v791 = vsel %vm768, %v315, 0
    %v794 = vsel %vm768, %v322, 0
    %v797 = vsel %vm768, %v329, 0
    %v800 = vsel %vm768, %v336, 0
    %v803 = vsel %vm768, %v343, 0
    %v806 = vsel %vm768, %v350, 0
    %v809 = vsel %vm768, %v357, 0
    %v812 = vsel %vm768, %v364, 0
    %v815 = vsel %vm768, %v371, 0
    %817 = vmatpush.bf16.msra.mxu0 %v677
    %818 = vmatpush.bf16.msra.mxu0 %v676
    %819 = vmatpush.bf16.msra.mxu0 %v675
    %820 = vmatpush.bf16.msra.mxu0 %v674
    %821 = vmatpush.bf16.msra.mxu0 %v673
    %822 = vmatpush.bf16.msra.mxu0 %v672
    %823 = vmatpush.bf16.msra.mxu0 %v671
    %824 = vmatpush.bf16.msra.mxu0 %v670
    %825 = vmatmul.bf16.gmra.mxu0 %v260
    %v826 = vpop.f32.mrf.mxu0
    %v827 = vadd.f32 %v472, %v826
    %v828 = vpop.f32.mrf.mxu0
    %v829 = vadd.f32 %v472, %v828
    %830 = vmatmul.bf16.gmra.mxu0 %v267
    %v831 = vpop.f32.mrf.mxu0
    %v832 = vadd.f32 %v472, %v831
    %v833 = vpop.f32.mrf.mxu0
    %v834 = vadd.f32 %v472, %v833
    %835 = vmatmul.bf16.gmra.mxu0 %v274
    %v836 = vpop.f32.mrf.mxu0
    %v837 = vadd.f32 %v472, %v836
    %v838 = vpop.f32.mrf.mxu0
    %v839 = vadd.f32 %v472, %v838
    %840 = vmatmul.bf16.gmra.mxu0 %v281
    %v841 = vpop.f32.mrf.mxu0
    %v842 = vadd.f32 %v472, %v841
    %v843 = vpop.f32.mrf.mxu0
    %v844 = vadd.f32 %v472, %v843
    %845 = vmatmul.bf16.gmra.mxu0 %v288
    %v846 = vpop.f32.mrf.mxu0
    %v847 = vadd.f32 %v472, %v846
    %v848 = vpop.f32.mrf.mxu0
    %v849 = vadd.f32 %v472, %v848
    %850 = vmatmul.bf16.gmra.mxu0 %v295
    %v851 = vpop.f32.mrf.mxu0
    %v852 = vadd.f32 %v472, %v851
    %v853 = vpop.f32.mrf.mxu0
    %v854 = vadd.f32 %v472, %v853
    %855 = vmatmul.bf16.gmra.mxu0 %v302
    %v856 = vpop.f32.mrf.mxu0
    %v857 = vadd.f32 %v472, %v856
    %v858 = vpop.f32.mrf.mxu0
    %v859 = vadd.f32 %v472, %v858
    %860 = vmatmul.bf16.gmra.mxu0 %v309
    %v861 = vpop.f32.mrf.mxu0
    %v862 = vadd.f32 %v472, %v861
    %v863 = vpop.f32.mrf.mxu0
    %v864 = vadd.f32 %v472, %v863
    %865 = vmatmul.bf16.gmra.mxu0 %v316
    %v866 = vpop.f32.mrf.mxu0
    %v867 = vadd.f32 %v472, %v866
    %v868 = vpop.f32.mrf.mxu0
    %v869 = vadd.f32 %v472, %v868
    %870 = vmatmul.bf16.gmra.mxu0 %v323
    %v871 = vpop.f32.mrf.mxu0
    %v872 = vadd.f32 %v472, %v871
    %v873 = vpop.f32.mrf.mxu0
    %v874 = vadd.f32 %v472, %v873
    %875 = vmatmul.bf16.gmra.mxu0 %v330
    %v876 = vpop.f32.mrf.mxu0
    %v877 = vadd.f32 %v472, %v876
    %v878 = vpop.f32.mrf.mxu0
    %v879 = vadd.f32 %v472, %v878
    %880 = vmatmul.bf16.gmra.mxu0 %v337
    %v881 = vpop.f32.mrf.mxu0
    %v882 = vadd.f32 %v472, %v881
    %v883 = vpop.f32.mrf.mxu0
    %v884 = vadd.f32 %v472, %v883
    %885 = vmatmul.bf16.gmra.mxu0 %v344
    %v886 = vpop.f32.mrf.mxu0
    %v887 = vadd.f32 %v472, %v886
    %v888 = vpop.f32.mrf.mxu0
    %v889 = vadd.f32 %v472, %v888
    %890 = vmatmul.bf16.gmra.mxu0 %v351
    %v891 = vpop.f32.mrf.mxu0
    %v892 = vadd.f32 %v472, %v891
    %v893 = vpop.f32.mrf.mxu0
    %v894 = vadd.f32 %v472, %v893
    %895 = vmatmul.bf16.gmra.mxu0 %v358
    %v896 = vpop.f32.mrf.mxu0
    %v897 = vadd.f32 %v472, %v896
    %v898 = vpop.f32.mrf.mxu0
    %v899 = vadd.f32 %v472, %v898
    %900 = vmatmul.bf16.gmra.mxu0 %v365
    %v901 = vpop.f32.mrf.mxu0
    %v902 = vadd.f32 %v472, %v901
    %v903 = vpop.f32.mrf.mxu0
    %v904 = vadd.f32 %v472, %v903
    %905 = vdwg.mxu0
    %906 = vmatpush.bf16.msra.mxu0 %v685
    %907 = vmatpush.bf16.msra.mxu0 %v684
    %908 = vmatpush.bf16.msra.mxu0 %v683
    %909 = vmatpush.bf16.msra.mxu0 %v682
    %910 = vmatpush.bf16.msra.mxu0 %v681
    %911 = vmatpush.bf16.msra.mxu0 %v680
    %912 = vmatpush.bf16.msra.mxu0 %v679
    %913 = vmatpush.bf16.msra.mxu0 %v678
    %914 = vmatmul.bf16.gmra.mxu0 %v261
    %v915 = vpop.f32.mrf.mxu0
    %v916 = vadd.f32 %v827, %v915
    %v917 = vpop.f32.mrf.mxu0
    %v918 = vadd.f32 %v829, %v917
    %919 = vmatmul.bf16.gmra.mxu0 %v268
    %v920 = vpop.f32.mrf.mxu0
    %v921 = vadd.f32 %v832, %v920
    %v922 = vpop.f32.mrf.mxu0
    %v923 = vadd.f32 %v834, %v922
    %924 = vmatmul.bf16.gmra.mxu0 %v275
    %v925 = vpop.f32.mrf.mxu0
    %v926 = vadd.f32 %v837, %v925
    %v927 = vpop.f32.mrf.mxu0
    %v928 = vadd.f32 %v839, %v927
    %929 = vmatmul.bf16.gmra.mxu0 %v282
    %v930 = vpop.f32.mrf.mxu0
    %v931 = vadd.f32 %v842, %v930
    %v932 = vpop.f32.mrf.mxu0
    %v933 = vadd.f32 %v844, %v932
    %934 = vmatmul.bf16.gmra.mxu0 %v289
    %v935 = vpop.f32.mrf.mxu0
    %v936 = vadd.f32 %v847, %v935
    %v937 = vpop.f32.mrf.mxu0
    %v938 = vadd.f32 %v849, %v937
    %939 = vmatmul.bf16.gmra.mxu0 %v296
    %v940 = vpop.f32.mrf.mxu0
    %v941 = vadd.f32 %v852, %v940
    %v942 = vpop.f32.mrf.mxu0
    %v943 = vadd.f32 %v854, %v942
    %944 = vmatmul.bf16.gmra.mxu0 %v303
    %v945 = vpop.f32.mrf.mxu0
    %v946 = vadd.f32 %v857, %v945
    %v947 = vpop.f32.mrf.mxu0
    %v948 = vadd.f32 %v859, %v947
    %949 = vmatmul.bf16.gmra.mxu0 %v310
    %v950 = vpop.f32.mrf.mxu0
    %v951 = vadd.f32 %v862, %v950
    %v952 = vpop.f32.mrf.mxu0
    %v953 = vadd.f32 %v864, %v952
    %954 = vmatmul.bf16.gmra.mxu0 %v317
    %v955 = vpop.f32.mrf.mxu0
    %v956 = vadd.f32 %v867, %v955
    %v957 = vpop.f32.mrf.mxu0
    %v958 = vadd.f32 %v869, %v957
    %959 = vmatmul.bf16.gmra.mxu0 %v324
    %v960 = vpop.f32.mrf.mxu0
    %v961 = vadd.f32 %v872, %v960
    %v962 = vpop.f32.mrf.mxu0
    %v963 = vadd.f32 %v874, %v962
    %964 = vmatmul.bf16.gmra.mxu0 %v331
    %v965 = vpop.f32.mrf.mxu0
    %v966 = vadd.f32 %v877, %v965
    %v967 = vpop.f32.mrf.mxu0
    %v968 = vadd.f32 %v879, %v967
    %969 = vmatmul.bf16.gmra.mxu0 %v338
    %v970 = vpop.f32.mrf.mxu0
    %v971 = vadd.f32 %v882, %v970
    %v972 = vpop.f32.mrf.mxu0
    %v973 = vadd.f32 %v884, %v972
    %974 = vmatmul.bf16.gmra.mxu0 %v345
    %v975 = vpop.f32.mrf.mxu0
    %v976 = vadd.f32 %v887, %v975
    %v977 = vpop.f32.mrf.mxu0
    %v978 = vadd.f32 %v889, %v977
    %979 = vmatmul.bf16.gmra.mxu0 %v352
    %v980 = vpop.f32.mrf.mxu0
    %v981 = vadd.f32 %v892, %v980
    %v982 = vpop.f32.mrf.mxu0
    %v983 = vadd.f32 %v894, %v982
    %984 = vmatmul.bf16.gmra.mxu0 %v359
    %v985 = vpop.f32.mrf.mxu0
    %v986 = vadd.f32 %v897, %v985
    %v987 = vpop.f32.mrf.mxu0
    %v988 = vadd.f32 %v899, %v987
    %989 = vmatmul.bf16.gmra.mxu0 %v366
    %v990 = vpop.f32.mrf.mxu0
    %v991 = vadd.f32 %v902, %v990
    %v992 = vpop.f32.mrf.mxu0
    %v993 = vadd.f32 %v904, %v992
    %994 = vdwg.mxu0
    %995 = vmatpush.bf16.msra.mxu0 %v693
    %996 = vmatpush.bf16.msra.mxu0 %v692
    %997 = vmatpush.bf16.msra.mxu0 %v691
    %998 = vmatpush.bf16.msra.mxu0 %v690
    %999 = vmatpush.bf16.msra.mxu0 %v689
    %1000 = vmatpush.bf16.msra.mxu0 %v688
    %1001 = vmatpush.bf16.msra.mxu0 %v687
    %1002 = vmatpush.bf16.msra.mxu0 %v686
    %1003 = vmatmul.bf16.gmra.mxu0 %v262
    %v1004 = vpop.f32.mrf.mxu0
    %v1005 = vadd.f32 %v916, %v1004
    %v1006 = vpop.f32.mrf.mxu0
    %v1007 = vadd.f32 %v918, %v1006
    %1008 = vmatmul.bf16.gmra.mxu0 %v269
    %v1009 = vpop.f32.mrf.mxu0
    %v1010 = vadd.f32 %v921, %v1009
    %v1011 = vpop.f32.mrf.mxu0
    %v1012 = vadd.f32 %v923, %v1011
    %1013 = vmatmul.bf16.gmra.mxu0 %v276
    %v1014 = vpop.f32.mrf.mxu0
    %v1015 = vadd.f32 %v926, %v1014
    %v1016 = vpop.f32.mrf.mxu0
    %v1017 = vadd.f32 %v928, %v1016
    %1018 = vmatmul.bf16.gmra.mxu0 %v283
    %v1019 = vpop.f32.mrf.mxu0
    %v1020 = vadd.f32 %v931, %v1019
    %v1021 = vpop.f32.mrf.mxu0
    %v1022 = vadd.f32 %v933, %v1021
    %1023 = vmatmul.bf16.gmra.mxu0 %v290
    %v1024 = vpop.f32.mrf.mxu0
    %v1025 = vadd.f32 %v936, %v1024
    %v1026 = vpop.f32.mrf.mxu0
    %v1027 = vadd.f32 %v938, %v1026
    %1028 = vmatmul.bf16.gmra.mxu0 %v297
    %v1029 = vpop.f32.mrf.mxu0
    %v1030 = vadd.f32 %v941, %v1029
    %v1031 = vpop.f32.mrf.mxu0
    %v1032 = vadd.f32 %v943, %v1031
    %1033 = vmatmul.bf16.gmra.mxu0 %v304
    %v1034 = vpop.f32.mrf.mxu0
    %v1035 = vadd.f32 %v946, %v1034
    %v1036 = vpop.f32.mrf.mxu0
    %v1037 = vadd.f32 %v948, %v1036
    %1038 = vmatmul.bf16.gmra.mxu0 %v311
    %v1039 = vpop.f32.mrf.mxu0
    %v1040 = vadd.f32 %v951, %v1039
    %v1041 = vpop.f32.mrf.mxu0
    %v1042 = vadd.f32 %v953, %v1041
    %1043 = vmatmul.bf16.gmra.mxu0 %v318
    %v1044 = vpop.f32.mrf.mxu0
    %v1045 = vadd.f32 %v956, %v1044
    %v1046 = vpop.f32.mrf.mxu0
    %v1047 = vadd.f32 %v958, %v1046
    %1048 = vmatmul.bf16.gmra.mxu0 %v325
    %v1049 = vpop.f32.mrf.mxu0
    %v1050 = vadd.f32 %v961, %v1049
    %v1051 = vpop.f32.mrf.mxu0
    %v1052 = vadd.f32 %v963, %v1051
    %1053 = vmatmul.bf16.gmra.mxu0 %v332
    %v1054 = vpop.f32.mrf.mxu0
    %v1055 = vadd.f32 %v966, %v1054
    %v1056 = vpop.f32.mrf.mxu0
    %v1057 = vadd.f32 %v968, %v1056
    %1058 = vmatmul.bf16.gmra.mxu0 %v339
    %v1059 = vpop.f32.mrf.mxu0
    %v1060 = vadd.f32 %v971, %v1059
    %v1061 = vpop.f32.mrf.mxu0
    %v1062 = vadd.f32 %v973, %v1061
    %1063 = vmatmul.bf16.gmra.mxu0 %v346
    %v1064 = vpop.f32.mrf.mxu0
    %v1065 = vadd.f32 %v976, %v1064
    %v1066 = vpop.f32.mrf.mxu0
    %v1067 = vadd.f32 %v978, %v1066
    %1068 = vmatmul.bf16.gmra.mxu0 %v353
    %v1069 = vpop.f32.mrf.mxu0
    %v1070 = vadd.f32 %v981, %v1069
    %v1071 = vpop.f32.mrf.mxu0
    %v1072 = vadd.f32 %v983, %v1071
    %1073 = vmatmul.bf16.gmra.mxu0 %v360
    %v1074 = vpop.f32.mrf.mxu0
    %v1075 = vadd.f32 %v986, %v1074
    %v1076 = vpop.f32.mrf.mxu0
    %v1077 = vadd.f32 %v988, %v1076
    %1078 = vmatmul.bf16.gmra.mxu0 %v367
    %v1079 = vpop.f32.mrf.mxu0
    %v1080 = vadd.f32 %v991, %v1079
    %v1081 = vpop.f32.mrf.mxu0
    %v1082 = vadd.f32 %v993, %v1081
    %1083 = vdwg.mxu0
    %1084 = vmatpush.bf16.msra.mxu0 %v701
    %1085 = vmatpush.bf16.msra.mxu0 %v700
    %1086 = vmatpush.bf16.msra.mxu0 %v699
    %1087 = vmatpush.bf16.msra.mxu0 %v698
    %1088 = vmatpush.bf16.msra.mxu0 %v697
    %1089 = vmatpush.bf16.msra.mxu0 %v696
    %1090 = vmatpush.bf16.msra.mxu0 %v695
    %1091 = vmatpush.bf16.msra.mxu0 %v694
    %1092 = vmatmul.bf16.gmra.mxu0 %v263
    %v1093 = vpop.f32.mrf.mxu0
    %v1094 = vadd.f32 %v1005, %v1093
    %v1095 = vpop.f32.mrf.mxu0
    %v1096 = vadd.f32 %v1007, %v1095
    %1097 = vmatmul.bf16.gmra.mxu0 %v270
    %v1098 = vpop.f32.mrf.mxu0
    %v1099 = vadd.f32 %v1010, %v1098
    %v1100 = vpop.f32.mrf.mxu0
    %v1101 = vadd.f32 %v1012, %v1100
    %1102 = vmatmul.bf16.gmra.mxu0 %v277
    %v1103 = vpop.f32.mrf.mxu0
    %v1104 = vadd.f32 %v1015, %v1103
    %v1105 = vpop.f32.mrf.mxu0
    %v1106 = vadd.f32 %v1017, %v1105
    %1107 = vmatmul.bf16.gmra.mxu0 %v284
    %v1108 = vpop.f32.mrf.mxu0
    %v1109 = vadd.f32 %v1020, %v1108
    %v1110 = vpop.f32.mrf.mxu0
    %v1111 = vadd.f32 %v1022, %v1110
    %1112 = vmatmul.bf16.gmra.mxu0 %v291
    %v1113 = vpop.f32.mrf.mxu0
    %v1114 = vadd.f32 %v1025, %v1113
    %v1115 = vpop.f32.mrf.mxu0
    %v1116 = vadd.f32 %v1027, %v1115
    %1117 = vmatmul.bf16.gmra.mxu0 %v298
    %v1118 = vpop.f32.mrf.mxu0
    %v1119 = vadd.f32 %v1030, %v1118
    %v1120 = vpop.f32.mrf.mxu0
    %v1121 = vadd.f32 %v1032, %v1120
    %1122 = vmatmul.bf16.gmra.mxu0 %v305
    %v1123 = vpop.f32.mrf.mxu0
    %v1124 = vadd.f32 %v1035, %v1123
    %v1125 = vpop.f32.mrf.mxu0
    %v1126 = vadd.f32 %v1037, %v1125
    %1127 = vmatmul.bf16.gmra.mxu0 %v312
    %v1128 = vpop.f32.mrf.mxu0
    %v1129 = vadd.f32 %v1040, %v1128
    %v1130 = vpop.f32.mrf.mxu0
    %v1131 = vadd.f32 %v1042, %v1130
    %1132 = vmatmul.bf16.gmra.mxu0 %v319
    %v1133 = vpop.f32.mrf.mxu0
    %v1134 = vadd.f32 %v1045, %v1133
    %v1135 = vpop.f32.mrf.mxu0
    %v1136 = vadd.f32 %v1047, %v1135
    %1137 = vmatmul.bf16.gmra.mxu0 %v326
    %v1138 = vpop.f32.mrf.mxu0
    %v1139 = vadd.f32 %v1050, %v1138
    %v1140 = vpop.f32.mrf.mxu0
    %v1141 = vadd.f32 %v1052, %v1140
    %1142 = vmatmul.bf16.gmra.mxu0 %v333
    %v1143 = vpop.f32.mrf.mxu0
    %v1144 = vadd.f32 %v1055, %v1143
    %v1145 = vpop.f32.mrf.mxu0
    %v1146 = vadd.f32 %v1057, %v1145
    %1147 = vmatmul.bf16.gmra.mxu0 %v340
    %v1148 = vpop.f32.mrf.mxu0
    %v1149 = vadd.f32 %v1060, %v1148
    %v1150 = vpop.f32.mrf.mxu0
    %v1151 = vadd.f32 %v1062, %v1150
    %1152 = vmatmul.bf16.gmra.mxu0 %v347
    %v1153 = vpop.f32.mrf.mxu0
    %v1154 = vadd.f32 %v1065, %v1153
    %v1155 = vpop.f32.mrf.mxu0
    %v1156 = vadd.f32 %v1067, %v1155
    %1157 = vmatmul.bf16.gmra.mxu0 %v354
    %v1158 = vpop.f32.mrf.mxu0
    %v1159 = vadd.f32 %v1070, %v1158
    %v1160 = vpop.f32.mrf.mxu0
    %v1161 = vadd.f32 %v1072, %v1160
    %1162 = vmatmul.bf16.gmra.mxu0 %v361
    %v1163 = vpop.f32.mrf.mxu0
    %v1164 = vadd.f32 %v1075, %v1163
    %v1165 = vpop.f32.mrf.mxu0
    %v1166 = vadd.f32 %v1077, %v1165
    %1167 = vmatmul.bf16.gmra.mxu0 %v368
    %v1168 = vpop.f32.mrf.mxu0
    %v1169 = vadd.f32 %v1080, %v1168
    %v1170 = vpop.f32.mrf.mxu0
    %v1171 = vadd.f32 %v1082, %v1170
    %1172 = vdwg.mxu0
    %1173 = vmatpush.bf16.msra.mxu0 %v709
    %1174 = vmatpush.bf16.msra.mxu0 %v708
    %1175 = vmatpush.bf16.msra.mxu0 %v707
    %1176 = vmatpush.bf16.msra.mxu0 %v706
    %1177 = vmatpush.bf16.msra.mxu0 %v705
    %1178 = vmatpush.bf16.msra.mxu0 %v704
    %1179 = vmatpush.bf16.msra.mxu0 %v703
    %1180 = vmatpush.bf16.msra.mxu0 %v702
    %1181 = vmatmul.bf16.gmra.mxu0 %v264
    %v1182 = vpop.f32.mrf.mxu0
    %v1183 = vadd.f32 %v1094, %v1182
    %v1184 = vpop.f32.mrf.mxu0
    %v1185 = vadd.f32 %v1096, %v1184
    %1186 = vmatmul.bf16.gmra.mxu0 %v271
    %v1187 = vpop.f32.mrf.mxu0
    %v1188 = vadd.f32 %v1099, %v1187
    %v1189 = vpop.f32.mrf.mxu0
    %v1190 = vadd.f32 %v1101, %v1189
    %1191 = vmatmul.bf16.gmra.mxu0 %v278
    %v1192 = vpop.f32.mrf.mxu0
    %v1193 = vadd.f32 %v1104, %v1192
    %v1194 = vpop.f32.mrf.mxu0
    %v1195 = vadd.f32 %v1106, %v1194
    %1196 = vmatmul.bf16.gmra.mxu0 %v285
    %v1197 = vpop.f32.mrf.mxu0
    %v1198 = vadd.f32 %v1109, %v1197
    %v1199 = vpop.f32.mrf.mxu0
    %v1200 = vadd.f32 %v1111, %v1199
    %1201 = vmatmul.bf16.gmra.mxu0 %v292
    %v1202 = vpop.f32.mrf.mxu0
    %v1203 = vadd.f32 %v1114, %v1202
    %v1204 = vpop.f32.mrf.mxu0
    %v1205 = vadd.f32 %v1116, %v1204
    %1206 = vmatmul.bf16.gmra.mxu0 %v299
    %v1207 = vpop.f32.mrf.mxu0
    %v1208 = vadd.f32 %v1119, %v1207
    %v1209 = vpop.f32.mrf.mxu0
    %v1210 = vadd.f32 %v1121, %v1209
    %1211 = vmatmul.bf16.gmra.mxu0 %v306
    %v1212 = vpop.f32.mrf.mxu0
    %v1213 = vadd.f32 %v1124, %v1212
    %v1214 = vpop.f32.mrf.mxu0
    %v1215 = vadd.f32 %v1126, %v1214
    %1216 = vmatmul.bf16.gmra.mxu0 %v313
    %v1217 = vpop.f32.mrf.mxu0
    %v1218 = vadd.f32 %v1129, %v1217
    %v1219 = vpop.f32.mrf.mxu0
    %v1220 = vadd.f32 %v1131, %v1219
    %1221 = vmatmul.bf16.gmra.mxu0 %v320
    %v1222 = vpop.f32.mrf.mxu0
    %v1223 = vadd.f32 %v1134, %v1222
    %v1224 = vpop.f32.mrf.mxu0
    %v1225 = vadd.f32 %v1136, %v1224
    %1226 = vmatmul.bf16.gmra.mxu0 %v327
    %v1227 = vpop.f32.mrf.mxu0
    %v1228 = vadd.f32 %v1139, %v1227
    %v1229 = vpop.f32.mrf.mxu0
    %v1230 = vadd.f32 %v1141, %v1229
    %1231 = vmatmul.bf16.gmra.mxu0 %v334
    %v1232 = vpop.f32.mrf.mxu0
    %v1233 = vadd.f32 %v1144, %v1232
    %v1234 = vpop.f32.mrf.mxu0
    %v1235 = vadd.f32 %v1146, %v1234
    %1236 = vmatmul.bf16.gmra.mxu0 %v341
    %v1237 = vpop.f32.mrf.mxu0
    %v1238 = vadd.f32 %v1149, %v1237
    %v1239 = vpop.f32.mrf.mxu0
    %v1240 = vadd.f32 %v1151, %v1239
    %1241 = vmatmul.bf16.gmra.mxu0 %v348
    %v1242 = vpop.f32.mrf.mxu0
    %v1243 = vadd.f32 %v1154, %v1242
    %v1244 = vpop.f32.mrf.mxu0
    %v1245 = vadd.f32 %v1156, %v1244
    %1246 = vmatmul.bf16.gmra.mxu0 %v355
    %v1247 = vpop.f32.mrf.mxu0
    %v1248 = vadd.f32 %v1159, %v1247
    %v1249 = vpop.f32.mrf.mxu0
    %v1250 = vadd.f32 %v1161, %v1249
    %1251 = vmatmul.bf16.gmra.mxu0 %v362
    %v1252 = vpop.f32.mrf.mxu0
    %v1253 = vadd.f32 %v1164, %v1252
    %v1254 = vpop.f32.mrf.mxu0
    %v1255 = vadd.f32 %v1166, %v1254
    %1256 = vmatmul.bf16.gmra.mxu0 %v369
    %v1257 = vpop.f32.mrf.mxu0
    %v1258 = vadd.f32 %v1169, %v1257
    %v1259 = vpop.f32.mrf.mxu0
    %v1260 = vadd.f32 %v1171, %v1259
    %1261 = vdwg.mxu0
    %1262 = vmatpush.bf16.msra.mxu0 %v717
    %1263 = vmatpush.bf16.msra.mxu0 %v716
    %1264 = vmatpush.bf16.msra.mxu0 %v715
    %1265 = vmatpush.bf16.msra.mxu0 %v714
    %1266 = vmatpush.bf16.msra.mxu0 %v713
    %1267 = vmatpush.bf16.msra.mxu0 %v712
    %1268 = vmatpush.bf16.msra.mxu0 %v711
    %1269 = vmatpush.bf16.msra.mxu0 %v710
    %1270 = vmatmul.bf16.gmra.mxu0 %v265
    %v1271 = vpop.f32.mrf.mxu0
    %v1272 = vadd.f32 %v1183, %v1271
    %v1273 = vpop.f32.mrf.mxu0
    %v1274 = vadd.f32 %v1185, %v1273
    %1275 = vmatmul.bf16.gmra.mxu0 %v272
    %v1276 = vpop.f32.mrf.mxu0
    %v1277 = vadd.f32 %v1188, %v1276
    %v1278 = vpop.f32.mrf.mxu0
    %v1279 = vadd.f32 %v1190, %v1278
    %1280 = vmatmul.bf16.gmra.mxu0 %v279
    %v1281 = vpop.f32.mrf.mxu0
    %v1282 = vadd.f32 %v1193, %v1281
    %v1283 = vpop.f32.mrf.mxu0
    %v1284 = vadd.f32 %v1195, %v1283
    %1285 = vmatmul.bf16.gmra.mxu0 %v286
    %v1286 = vpop.f32.mrf.mxu0
    %v1287 = vadd.f32 %v1198, %v1286
    %v1288 = vpop.f32.mrf.mxu0
    %v1289 = vadd.f32 %v1200, %v1288
    %1290 = vmatmul.bf16.gmra.mxu0 %v293
    %v1291 = vpop.f32.mrf.mxu0
    %v1292 = vadd.f32 %v1203, %v1291
    %v1293 = vpop.f32.mrf.mxu0
    %v1294 = vadd.f32 %v1205, %v1293
    %1295 = vmatmul.bf16.gmra.mxu0 %v300
    %v1296 = vpop.f32.mrf.mxu0
    %v1297 = vadd.f32 %v1208, %v1296
    %v1298 = vpop.f32.mrf.mxu0
    %v1299 = vadd.f32 %v1210, %v1298
    %1300 = vmatmul.bf16.gmra.mxu0 %v307
    %v1301 = vpop.f32.mrf.mxu0
    %v1302 = vadd.f32 %v1213, %v1301
    %v1303 = vpop.f32.mrf.mxu0
    %v1304 = vadd.f32 %v1215, %v1303
    %1305 = vmatmul.bf16.gmra.mxu0 %v314
    %v1306 = vpop.f32.mrf.mxu0
    %v1307 = vadd.f32 %v1218, %v1306
    %v1308 = vpop.f32.mrf.mxu0
    %v1309 = vadd.f32 %v1220, %v1308
    %1310 = vmatmul.bf16.gmra.mxu0 %v321
    %v1311 = vpop.f32.mrf.mxu0
    %v1312 = vadd.f32 %v1223, %v1311
    %v1313 = vpop.f32.mrf.mxu0
    %v1314 = vadd.f32 %v1225, %v1313
    %1315 = vmatmul.bf16.gmra.mxu0 %v328
    %v1316 = vpop.f32.mrf.mxu0
    %v1317 = vadd.f32 %v1228, %v1316
    %v1318 = vpop.f32.mrf.mxu0
    %v1319 = vadd.f32 %v1230, %v1318
    %1320 = vmatmul.bf16.gmra.mxu0 %v335
    %v1321 = vpop.f32.mrf.mxu0
    %v1322 = vadd.f32 %v1233, %v1321
    %v1323 = vpop.f32.mrf.mxu0
    %v1324 = vadd.f32 %v1235, %v1323
    %1325 = vmatmul.bf16.gmra.mxu0 %v342
    %v1326 = vpop.f32.mrf.mxu0
    %v1327 = vadd.f32 %v1238, %v1326
    %v1328 = vpop.f32.mrf.mxu0
    %v1329 = vadd.f32 %v1240, %v1328
    %1330 = vmatmul.bf16.gmra.mxu0 %v349
    %v1331 = vpop.f32.mrf.mxu0
    %v1332 = vadd.f32 %v1243, %v1331
    %v1333 = vpop.f32.mrf.mxu0
    %v1334 = vadd.f32 %v1245, %v1333
    %1335 = vmatmul.bf16.gmra.mxu0 %v356
    %v1336 = vpop.f32.mrf.mxu0
    %v1337 = vadd.f32 %v1248, %v1336
    %v1338 = vpop.f32.mrf.mxu0
    %v1339 = vadd.f32 %v1250, %v1338
    %1340 = vmatmul.bf16.gmra.mxu0 %v363
    %v1341 = vpop.f32.mrf.mxu0
    %v1342 = vadd.f32 %v1253, %v1341
    %v1343 = vpop.f32.mrf.mxu0
    %v1344 = vadd.f32 %v1255, %v1343
    %1345 = vmatmul.bf16.gmra.mxu0 %v370
    %v1346 = vpop.f32.mrf.mxu0
    %v1347 = vadd.f32 %v1258, %v1346
    %v1348 = vpop.f32.mrf.mxu0
    %v1349 = vadd.f32 %v1260, %v1348
    %1350 = vdwg.mxu0
    %1351 = vmatpush.bf16.msra.mxu0 0
    %1352 = vmatpush.bf16.msra.mxu0 0
    %1353 = vmatpush.bf16.msra.mxu0 0
    %1354 = vmatpush.bf16.msra.mxu0 0
    %1355 = vmatpush.bf16.msra.mxu0 0
    %1356 = vmatpush.bf16.msra.mxu0 0
    %1357 = vmatpush.bf16.msra.mxu0 0
    %1358 = vmatpush.bf16.msra.mxu0 %v718
    %1359 = vmatmul.bf16.gmra.mxu0 %v770
    %v1360 = vpop.f32.mrf.mxu0
    %v1361 = vadd.f32 %v1272, %v1360
    %v1362 = vpop.f32.mrf.mxu0
    %v1363 = vadd.f32 %v1274, %v1362
    %1364 = vmatmul.bf16.gmra.mxu0 %v773
    %v1365 = vpop.f32.mrf.mxu0
    %v1366 = vadd.f32 %v1277, %v1365
    %v1367 = vpop.f32.mrf.mxu0
    %v1368 = vadd.f32 %v1279, %v1367
    %1369 = vmatmul.bf16.gmra.mxu0 %v776
    %v1370 = vpop.f32.mrf.mxu0
    %v1371 = vadd.f32 %v1282, %v1370
    %v1372 = vpop.f32.mrf.mxu0
    %v1373 = vadd.f32 %v1284, %v1372
    %1374 = vmatmul.bf16.gmra.mxu0 %v779
    %v1375 = vpop.f32.mrf.mxu0
    %v1376 = vadd.f32 %v1287, %v1375
    %v1377 = vpop.f32.mrf.mxu0
    %v1378 = vadd.f32 %v1289, %v1377
    %1379 = vmatmul.bf16.gmra.mxu0 %v782
    %v1380 = vpop.f32.mrf.mxu0
    %v1381 = vadd.f32 %v1292, %v1380
    %v1382 = vpop.f32.mrf.mxu0
    %v1383 = vadd.f32 %v1294, %v1382
    %1384 = vmatmul.bf16.gmra.mxu0 %v785
    %v1385 = vpop.f32.mrf.mxu0
    %v1386 = vadd.f32 %v1297, %v1385
    %v1387 = vpop.f32.mrf.mxu0
    %v1388 = vadd.f32 %v1299, %v1387
    %1389 = vmatmul.bf16.gmra.mxu0 %v788
    %v1390 = vpop.f32.mrf.mxu0
    %v1391 = vadd.f32 %v1302, %v1390
    %v1392 = vpop.f32.mrf.mxu0
    %v1393 = vadd.f32 %v1304, %v1392
    %1394 = vmatmul.bf16.gmra.mxu0 %v791
    %v1395 = vpop.f32.mrf.mxu0
    %v1396 = vadd.f32 %v1307, %v1395
    %v1397 = vpop.f32.mrf.mxu0
    %v1398 = vadd.f32 %v1309, %v1397
    %1399 = vmatmul.bf16.gmra.mxu0 %v794
    %v1400 = vpop.f32.mrf.mxu0
    %v1401 = vadd.f32 %v1312, %v1400
    %v1402 = vpop.f32.mrf.mxu0
    %v1403 = vadd.f32 %v1314, %v1402
    %1404 = vmatmul.bf16.gmra.mxu0 %v797
    %v1405 = vpop.f32.mrf.mxu0
    %v1406 = vadd.f32 %v1317, %v1405
    %v1407 = vpop.f32.mrf.mxu0
    %v1408 = vadd.f32 %v1319, %v1407
    %1409 = vmatmul.bf16.gmra.mxu0 %v800
    %v1410 = vpop.f32.mrf.mxu0
    %v1411 = vadd.f32 %v1322, %v1410
    %v1412 = vpop.f32.mrf.mxu0
    %v1413 = vadd.f32 %v1324, %v1412
    %1414 = vmatmul.bf16.gmra.mxu0 %v803
    %v1415 = vpop.f32.mrf.mxu0
    %v1416 = vadd.f32 %v1327, %v1415
    %v1417 = vpop.f32.mrf.mxu0
    %v1418 = vadd.f32 %v1329, %v1417
    %1419 = vmatmul.bf16.gmra.mxu0 %v806
    %v1420 = vpop.f32.mrf.mxu0
    %v1421 = vadd.f32 %v1332, %v1420
    %v1422 = vpop.f32.mrf.mxu0
    %v1423 = vadd.f32 %v1334, %v1422
    %1424 = vmatmul.bf16.gmra.mxu0 %v809
    %v1425 = vpop.f32.mrf.mxu0
    %v1426 = vadd.f32 %v1337, %v1425
    %v1427 = vpop.f32.mrf.mxu0
    %v1428 = vadd.f32 %v1339, %v1427
    %1429 = vmatmul.bf16.gmra.mxu0 %v812
    %v1430 = vpop.f32.mrf.mxu0
    %v1431 = vadd.f32 %v1342, %v1430
    %v1432 = vpop.f32.mrf.mxu0
    %v1433 = vadd.f32 %v1344, %v1432
    %1434 = vmatmul.bf16.gmra.mxu0 %v815
    %v1435 = vpop.f32.mrf.mxu0
    %v1436 = vadd.f32 %v1347, %v1435
    %v1437 = vpop.f32.mrf.mxu0
    %v1438 = vadd.f32 %v1349, %v1437
    %1439 = vdwg.mxu0
    %vm1440 = vcmp.gt.f32.partialorder %v1361, 0.0
    %vm1441 = vcmp.gt.f32.partialorder %v1363, 0.0
    %vm1442 = vcmp.gt.f32.partialorder %v1366, 0.0
    %vm1443 = vcmp.gt.f32.partialorder %v1368, 0.0
    %vm1444 = vcmp.gt.f32.partialorder %v1371, 0.0
    %vm1445 = vcmp.gt.f32.partialorder %v1373, 0.0
    %vm1446 = vcmp.gt.f32.partialorder %v1376, 0.0
    %vm1447 = vcmp.gt.f32.partialorder %v1378, 0.0
    %vm1448 = vcmp.gt.f32.partialorder %v1381, 0.0
    %vm1449 = vcmp.gt.f32.partialorder %v1383, 0.0
    %vm1450 = vcmp.gt.f32.partialorder %v1386, 0.0
    %vm1451 = vcmp.gt.f32.partialorder %v1388, 0.0
    %vm1452 = vcmp.gt.f32.partialorder %v1391, 0.0
    %vm1453 = vcmp.gt.f32.partialorder %v1393, 0.0
    %vm1454 = vcmp.gt.f32.partialorder %v1396, 0.0
    %vm1455 = vcmp.gt.f32.partialorder %v1398, 0.0
    %vm1456 = vcmp.gt.f32.partialorder %v1401, 0.0
    %vm1457 = vcmp.gt.f32.partialorder %v1403, 0.0
    %vm1458 = vcmp.gt.f32.partialorder %v1406, 0.0
    %vm1459 = vcmp.gt.f32.partialorder %v1408, 0.0
    %vm1460 = vcmp.gt.f32.partialorder %v1411, 0.0
    %vm1461 = vcmp.gt.f32.partialorder %v1413, 0.0
    %vm1462 = vcmp.gt.f32.partialorder %v1416, 0.0
    %vm1463 = vcmp.gt.f32.partialorder %v1418, 0.0
    %vm1464 = vcmp.gt.f32.partialorder %v1421, 0.0
    %vm1465 = vcmp.gt.f32.partialorder %v1423, 0.0
    %vm1466 = vcmp.gt.f32.partialorder %v1426, 0.0
    %vm1467 = vcmp.gt.f32.partialorder %v1428, 0.0
    %vm1468 = vcmp.gt.f32.partialorder %v1431, 0.0
    %vm1469 = vcmp.gt.f32.partialorder %v1433, 0.0
    %vm1470 = vcmp.gt.f32.partialorder %v1436, 0.0
    %vm1471 = vcmp.gt.f32.partialorder %v1438, 0.0
    %v1472 = vmul.f32 %v1361, 0.2
    %v1473 = vmul.f32 %v1363, 0.2
    %v1474 = vmul.f32 %v1366, 0.2
    %v1475 = vmul.f32 %v1368, 0.2
    %v1476 = vmul.f32 %v1371, 0.2
    %v1477 = vmul.f32 %v1373, 0.2
    %v1478 = vmul.f32 %v1376, 0.2
    %v1479 = vmul.f32 %v1378, 0.2
    %v1480 = vmul.f32 %v1381, 0.2
    %v1481 = vmul.f32 %v1383, 0.2
    %v1482 = vmul.f32 %v1386, 0.2
    %v1483 = vmul.f32 %v1388, 0.2
    %v1484 = vmul.f32 %v1391, 0.2
    %v1485 = vmul.f32 %v1393, 0.2
    %v1486 = vmul.f32 %v1396, 0.2
    %v1487 = vmul.f32 %v1398, 0.2
    %v1488 = vmul.f32 %v1401, 0.2
    %v1489 = vmul.f32 %v1403, 0.2
    %v1490 = vmul.f32 %v1406, 0.2
    %v1491 = vmul.f32 %v1408, 0.2
    %v1492 = vmul.f32 %v1411, 0.2
    %v1493 = vmul.f32 %v1413, 0.2
    %v1494 = vmul.f32 %v1416, 0.2
    %v1495 = vmul.f32 %v1418, 0.2
    %v1496 = vmul.f32 %v1421, 0.2
    %v1497 = vmul.f32 %v1423, 0.2
    %v1498 = vmul.f32 %v1426, 0.2
    %v1499 = vmul.f32 %v1428, 0.2
    %v1500 = vmul.f32 %v1431, 0.2
    %v1501 = vmul.f32 %v1433, 0.2
    %v1502 = vmul.f32 %v1436, 0.2
    %v1503 = vmul.f32 %v1438, 0.2
    %v1504 = vsel %vm1440, %v1361, %v1472
    %v1505 = vsel %vm1441, %v1363, %v1473
    %v1506 = vsel %vm1442, %v1366, %v1474
    %v1507 = vsel %vm1443, %v1368, %v1475
    %v1508 = vsel %vm1444, %v1371, %v1476
    %v1509 = vsel %vm1445, %v1373, %v1477
    %v1510 = vsel %vm1446, %v1376, %v1478
    %v1511 = vsel %vm1447, %v1378, %v1479
    %v1512 = vsel %vm1448, %v1381, %v1480
    %v1513 = vsel %vm1449, %v1383, %v1481
    %v1514 = vsel %vm1450, %v1386, %v1482
    %v1515 = vsel %vm1451, %v1388, %v1483
    %v1516 = vsel %vm1452, %v1391, %v1484
    %v1517 = vsel %vm1453, %v1393, %v1485
    %v1518 = vsel %vm1454, %v1396, %v1486
    %v1519 = vsel %vm1455, %v1398, %v1487
    %v1520 = vsel %vm1456, %v1401, %v1488
    %v1521 = vsel %vm1457, %v1403, %v1489
    %v1522 = vsel %vm1458, %v1406, %v1490
    %v1523 = vsel %vm1459, %v1408, %v1491
    %v1524 = vsel %vm1460, %v1411, %v1492
    %v1525 = vsel %vm1461, %v1413, %v1493
    %v1526 = vsel %vm1462, %v1416, %v1494
    %v1527 = vsel %vm1463, %v1418, %v1495
    %v1528 = vsel %vm1464, %v1421, %v1496
    %v1529 = vsel %vm1465, %v1423, %v1497
    %v1530 = vsel %vm1466, %v1426, %v1498
    %v1531 = vsel %vm1467, %v1428, %v1499
    %v1532 = vsel %vm1468, %v1431, %v1500
    %v1533 = vsel %vm1469, %v1433, %v1501
    %v1534 = vsel %vm1470, %v1436, %v1502
    %v1535 = vsel %vm1471, %v1438, %v1503
    %v1536 = vpack.c.bf16 %v1505, %v1504
    %v1537 = vpack.c.bf16 %v1507, %v1506
    %v1538 = vpack.c.bf16 %v1509, %v1508
    %v1539 = vpack.c.bf16 %v1511, %v1510
    %v1540 = vpack.c.bf16 %v1513, %v1512
    %v1541 = vpack.c.bf16 %v1515, %v1514
    %v1542 = vpack.c.bf16 %v1517, %v1516
    %v1543 = vpack.c.bf16 %v1519, %v1518
    %v1544 = vpack.c.bf16 %v1521, %v1520
    %v1545 = vpack.c.bf16 %v1523, %v1522
    %v1546 = vpack.c.bf16 %v1525, %v1524
    %v1547 = vpack.c.bf16 %v1527, %v1526
    %v1548 = vpack.c.bf16 %v1529, %v1528
    %v1549 = vpack.c.bf16 %v1531, %v1530
    %v1550 = vpack.c.bf16 %v1533, %v1532
    %v1551 = vpack.c.bf16 %v1535, %v1534
    %v1552 = vld [vmem:[%s3] sm:$0xf]
    %v1553 = vld [vmem:[%s3 + $0x4] sm:$0xf]
    %v1554 = vld [vmem:[%s3 + $0x8] sm:$0xf]
    %v1555 = vld [vmem:[%s3 + $0xc] sm:$0xf]
    %v1556 = vld [vmem:[%s3 + $0x10] sm:$0xf]
    %v1557 = vld [vmem:[%s3 + $0x14] sm:$0xf]
    %v1558 = vld [vmem:[%s3 + $0x18] sm:$0xf]
    %v1559 = vld [vmem:[%s3 + $0x1c] sm:$0xf]
    %v1560 = vld [vmem:[%s3 + $0x20] sm:$0xf]
    %v1561 = vld [vmem:[%s3 + $0x24] sm:$0xf]
    %v1562 = vld [vmem:[%s3 + $0x28] sm:$0xf]
    %v1563 = vld [vmem:[%s3 + $0x2c] sm:$0xf]
    %v1564 = vld [vmem:[%s3 + $0x30] sm:$0xf]
    %v1565 = vld [vmem:[%s3 + $0x34] sm:$0xf]
    %v1566 = vld [vmem:[%s3 + $0x38] sm:$0xf]
    %v1567 = vld [vmem:[%s3 + $0x3c] sm:$0xf]
    %v1568 = vld [vmem:[%s4] sm:$0x1]
    %v1570 = vperm.slane %v1568, 0
    %v1588 = vunpack.c.l.b16 %v1552
    %v1589 = vunpack.c.l.b16 %v1553
    %v1590 = vunpack.c.l.b16 %v1554
    %v1591 = vunpack.c.l.b16 %v1555
    %v1592 = vunpack.c.l.b16 %v1556
    %v1593 = vunpack.c.l.b16 %v1557
    %v1594 = vunpack.c.l.b16 %v1558
    %v1595 = vunpack.c.l.b16 %v1559
    %v1596 = vunpack.c.l.b16 %v1560
    %v1597 = vunpack.c.l.b16 %v1561
    %v1598 = vunpack.c.l.b16 %v1562
    %v1599 = vunpack.c.l.b16 %v1563
    %v1600 = vunpack.c.l.b16 %v1564
    %v1601 = vunpack.c.l.b16 %v1565
    %v1602 = vunpack.c.l.b16 %v1566
    %v1603 = vunpack.c.l.b16 %v1567
    %v1604 = vpack.c.b16 %v1589, %v1588
    %v1605 = vpack.c.b16 %v1591, %v1590
    %v1606 = vpack.c.b16 %v1593, %v1592
    %v1607 = vpack.c.b16 %v1595, %v1594
    %v1608 = vpack.c.b16 %v1597, %v1596
    %v1609 = vpack.c.b16 %v1599, %v1598
    %v1610 = vpack.c.b16 %v1601, %v1600
    %v1611 = vpack.c.b16 %v1603, %v1602
    %1620 = vmatpush.bf16.msra.mxu0 %v1611
    %1621 = vmatpush.bf16.msra.mxu0 %v1610
    %1622 = vmatpush.bf16.msra.mxu0 %v1609
    %1623 = vmatpush.bf16.msra.mxu0 %v1608
    %1624 = vmatpush.bf16.msra.mxu0 %v1607
    %1625 = vmatpush.bf16.msra.mxu0 %v1606
    %1626 = vmatpush.bf16.msra.mxu0 %v1605
    %1627 = vmatpush.bf16.msra.mxu0 %v1604
    %1628 = vmatmul.bf16.gmra.mxu0 %v1536
    %v1629 = vpop.f32.mrf.mxu0
    %v1630 = vadd.f32 %v1570, %v1629
    %v1631 = vpop.f32.mrf.mxu0
    %v1632 = vadd.f32 %v1570, %v1631
    %1633 = vmatmul.bf16.gmra.mxu0 %v1537
    %v1634 = vpop.f32.mrf.mxu0
    %v1635 = vadd.f32 %v1570, %v1634
    %v1636 = vpop.f32.mrf.mxu0
    %v1637 = vadd.f32 %v1570, %v1636
    %1638 = vmatmul.bf16.gmra.mxu0 %v1538
    %v1639 = vpop.f32.mrf.mxu0
    %v1640 = vadd.f32 %v1570, %v1639
    %v1641 = vpop.f32.mrf.mxu0
    %v1642 = vadd.f32 %v1570, %v1641
    %1643 = vmatmul.bf16.gmra.mxu0 %v1539
    %v1644 = vpop.f32.mrf.mxu0
    %v1645 = vadd.f32 %v1570, %v1644
    %v1646 = vpop.f32.mrf.mxu0
    %v1647 = vadd.f32 %v1570, %v1646
    %1648 = vmatmul.bf16.gmra.mxu0 %v1540
    %v1649 = vpop.f32.mrf.mxu0
    %v1650 = vadd.f32 %v1570, %v1649
    %v1651 = vpop.f32.mrf.mxu0
    %v1652 = vadd.f32 %v1570, %v1651
    %1653 = vmatmul.bf16.gmra.mxu0 %v1541
    %v1654 = vpop.f32.mrf.mxu0
    %v1655 = vadd.f32 %v1570, %v1654
    %v1656 = vpop.f32.mrf.mxu0
    %v1657 = vadd.f32 %v1570, %v1656
    %1658 = vmatmul.bf16.gmra.mxu0 %v1542
    %v1659 = vpop.f32.mrf.mxu0
    %v1660 = vadd.f32 %v1570, %v1659
    %v1661 = vpop.f32.mrf.mxu0
    %v1662 = vadd.f32 %v1570, %v1661
    %1663 = vmatmul.bf16.gmra.mxu0 %v1543
    %v1664 = vpop.f32.mrf.mxu0
    %v1665 = vadd.f32 %v1570, %v1664
    %v1666 = vpop.f32.mrf.mxu0
    %v1667 = vadd.f32 %v1570, %v1666
    %1668 = vmatmul.bf16.gmra.mxu0 %v1544
    %v1669 = vpop.f32.mrf.mxu0
    %v1670 = vadd.f32 %v1570, %v1669
    %v1671 = vpop.f32.mrf.mxu0
    %v1672 = vadd.f32 %v1570, %v1671
    %1673 = vmatmul.bf16.gmra.mxu0 %v1545
    %v1674 = vpop.f32.mrf.mxu0
    %v1675 = vadd.f32 %v1570, %v1674
    %v1676 = vpop.f32.mrf.mxu0
    %v1677 = vadd.f32 %v1570, %v1676
    %1678 = vmatmul.bf16.gmra.mxu0 %v1546
    %v1679 = vpop.f32.mrf.mxu0
    %v1680 = vadd.f32 %v1570, %v1679
    %v1681 = vpop.f32.mrf.mxu0
    %v1682 = vadd.f32 %v1570, %v1681
    %1683 = vmatmul.bf16.gmra.mxu0 %v1547
    %v1684 = vpop.f32.mrf.mxu0
    %v1685 = vadd.f32 %v1570, %v1684
    %v1686 = vpop.f32.mrf.mxu0
    %v1687 = vadd.f32 %v1570, %v1686
    %1688 = vmatmul.bf16.gmra.mxu0 %v1548
    %v1689 = vpop.f32.mrf.mxu0
    %v1690 = vadd.f32 %v1570, %v1689
    %v1691 = vpop.f32.mrf.mxu0
    %v1692 = vadd.f32 %v1570, %v1691
    %1693 = vmatmul.bf16.gmra.mxu0 %v1549
    %v1694 = vpop.f32.mrf.mxu0
    %v1695 = vadd.f32 %v1570, %v1694
    %v1696 = vpop.f32.mrf.mxu0
    %v1697 = vadd.f32 %v1570, %v1696
    %1698 = vmatmul.bf16.gmra.mxu0 %v1550
    %v1699 = vpop.f32.mrf.mxu0
    %v1700 = vadd.f32 %v1570, %v1699
    %v1701 = vpop.f32.mrf.mxu0
    %v1702 = vadd.f32 %v1570, %v1701
    %1703 = vmatmul.bf16.gmra.mxu0 %v1551
    %v1704 = vpop.f32.mrf.mxu0
    %v1705 = vadd.f32 %v1570, %v1704
    %v1706 = vpop.f32.mrf.mxu0
    %v1707 = vadd.f32 %v1570, %v1706
    %1708 = vdwg.mxu0
    %vm1709 = vcmp.gt.f32.partialorder %v1630, 0.0
    %vm1710 = vcmp.gt.f32.partialorder %v1632, 0.0
    %vm1711 = vcmp.gt.f32.partialorder %v1635, 0.0
    %vm1712 = vcmp.gt.f32.partialorder %v1637, 0.0
    %vm1713 = vcmp.gt.f32.partialorder %v1640, 0.0
    %vm1714 = vcmp.gt.f32.partialorder %v1642, 0.0
    %vm1715 = vcmp.gt.f32.partialorder %v1645, 0.0
    %vm1716 = vcmp.gt.f32.partialorder %v1647, 0.0
    %vm1717 = vcmp.gt.f32.partialorder %v1650, 0.0
    %vm1718 = vcmp.gt.f32.partialorder %v1652, 0.0
    %vm1719 = vcmp.gt.f32.partialorder %v1655, 0.0
    %vm1720 = vcmp.gt.f32.partialorder %v1657, 0.0
    %vm1721 = vcmp.gt.f32.partialorder %v1660, 0.0
    %vm1722 = vcmp.gt.f32.partialorder %v1662, 0.0
    %vm1723 = vcmp.gt.f32.partialorder %v1665, 0.0
    %vm1724 = vcmp.gt.f32.partialorder %v1667, 0.0
    %vm1725 = vcmp.gt.f32.partialorder %v1670, 0.0
    %vm1726 = vcmp.gt.f32.partialorder %v1672, 0.0
    %vm1727 = vcmp.gt.f32.partialorder %v1675, 0.0
    %vm1728 = vcmp.gt.f32.partialorder %v1677, 0.0
    %vm1729 = vcmp.gt.f32.partialorder %v1680, 0.0
    %vm1730 = vcmp.gt.f32.partialorder %v1682, 0.0
    %vm1731 = vcmp.gt.f32.partialorder %v1685, 0.0
    %vm1732 = vcmp.gt.f32.partialorder %v1687, 0.0
    %vm1733 = vcmp.gt.f32.partialorder %v1690, 0.0
    %vm1734 = vcmp.gt.f32.partialorder %v1692, 0.0
    %vm1735 = vcmp.gt.f32.partialorder %v1695, 0.0
    %vm1736 = vcmp.gt.f32.partialorder %v1697, 0.0
    %vm1737 = vcmp.gt.f32.partialorder %v1700, 0.0
    %vm1738 = vcmp.gt.f32.partialorder %v1702, 0.0
    %vm1739 = vcmp.gt.f32.partialorder %v1705, 0.0
    %vm1740 = vcmp.gt.f32.partialorder %v1707, 0.0
    %v1741 = vmul.f32 %v1630, 0.2
    %v1742 = vmul.f32 %v1632, 0.2
    %v1743 = vmul.f32 %v1635, 0.2
    %v1744 = vmul.f32 %v1637, 0.2
    %v1745 = vmul.f32 %v1640, 0.2
    %v1746 = vmul.f32 %v1642, 0.2
    %v1747 = vmul.f32 %v1645, 0.2
    %v1748 = vmul.f32 %v1647, 0.2
    %v1749 = vmul.f32 %v1650, 0.2
    %v1750 = vmul.f32 %v1652, 0.2
    %v1751 = vmul.f32 %v1655, 0.2
    %v1752 = vmul.f32 %v1657, 0.2
    %v1753 = vmul.f32 %v1660, 0.2
    %v1754 = vmul.f32 %v1662, 0.2
    %v1755 = vmul.f32 %v1665, 0.2
    %v1756 = vmul.f32 %v1667, 0.2
    %v1757 = vmul.f32 %v1670, 0.2
    %v1758 = vmul.f32 %v1672, 0.2
    %v1759 = vmul.f32 %v1675, 0.2
    %v1760 = vmul.f32 %v1677, 0.2
    %v1761 = vmul.f32 %v1680, 0.2
    %v1762 = vmul.f32 %v1682, 0.2
    %v1763 = vmul.f32 %v1685, 0.2
    %v1764 = vmul.f32 %v1687, 0.2
    %v1765 = vmul.f32 %v1690, 0.2
    %v1766 = vmul.f32 %v1692, 0.2
    %v1767 = vmul.f32 %v1695, 0.2
    %v1768 = vmul.f32 %v1697, 0.2
    %v1769 = vmul.f32 %v1700, 0.2
    %v1770 = vmul.f32 %v1702, 0.2
    %v1771 = vmul.f32 %v1705, 0.2
    %v1772 = vmul.f32 %v1707, 0.2
    %v1773 = vsel %vm1709, %v1630, %v1741
    %v1774 = vsel %vm1710, %v1632, %v1742
    %v1775 = vsel %vm1711, %v1635, %v1743
    %v1776 = vsel %vm1712, %v1637, %v1744
    %v1777 = vsel %vm1713, %v1640, %v1745
    %v1778 = vsel %vm1714, %v1642, %v1746
    %v1779 = vsel %vm1715, %v1645, %v1747
    %v1780 = vsel %vm1716, %v1647, %v1748
    %v1781 = vsel %vm1717, %v1650, %v1749
    %v1782 = vsel %vm1718, %v1652, %v1750
    %v1783 = vsel %vm1719, %v1655, %v1751
    %v1784 = vsel %vm1720, %v1657, %v1752
    %v1785 = vsel %vm1721, %v1660, %v1753
    %v1786 = vsel %vm1722, %v1662, %v1754
    %v1787 = vsel %vm1723, %v1665, %v1755
    %v1788 = vsel %vm1724, %v1667, %v1756
    %v1789 = vsel %vm1725, %v1670, %v1757
    %v1790 = vsel %vm1726, %v1672, %v1758
    %v1791 = vsel %vm1727, %v1675, %v1759
    %v1792 = vsel %vm1728, %v1677, %v1760
    %v1793 = vsel %vm1729, %v1680, %v1761
    %v1794 = vsel %vm1730, %v1682, %v1762
    %v1795 = vsel %vm1731, %v1685, %v1763
    %v1796 = vsel %vm1732, %v1687, %v1764
    %v1797 = vsel %vm1733, %v1690, %v1765
    %v1798 = vsel %vm1734, %v1692, %v1766
    %v1799 = vsel %vm1735, %v1695, %v1767
    %v1800 = vsel %vm1736, %v1697, %v1768
    %v1801 = vsel %vm1737, %v1700, %v1769
    %v1802 = vsel %vm1738, %v1702, %v1770
    %v1803 = vsel %vm1739, %v1705, %v1771
    %v1804 = vsel %vm1740, %v1707, %v1772
    %v1805 = vpack.c.bf16 %v1774, %v1773
    %v1806 = vpack.c.bf16 %v1776, %v1775
    %v1807 = vpack.c.bf16 %v1778, %v1777
    %v1808 = vpack.c.bf16 %v1780, %v1779
    %v1809 = vpack.c.bf16 %v1782, %v1781
    %v1810 = vpack.c.bf16 %v1784, %v1783
    %v1811 = vpack.c.bf16 %v1786, %v1785
    %v1812 = vpack.c.bf16 %v1788, %v1787
    %v1813 = vpack.c.bf16 %v1790, %v1789
    %v1814 = vpack.c.bf16 %v1792, %v1791
    %v1815 = vpack.c.bf16 %v1794, %v1793
    %v1816 = vpack.c.bf16 %v1796, %v1795
    %v1817 = vpack.c.bf16 %v1798, %v1797
    %v1818 = vpack.c.bf16 %v1800, %v1799
    %v1819 = vpack.c.bf16 %v1802, %v1801
    %v1820 = vpack.c.bf16 %v1804, %v1803
    %v1821 = vld [vmem:[%s5] sm:$0xf]
    %v1822 = vld [vmem:[%s5 + $0x4] sm:$0xf]
    %v1823 = vld [vmem:[%s5 + $0x8] sm:$0xf]
    %v1824 = vld [vmem:[%s5 + $0xc] sm:$0xf]
    %v1825 = vld [vmem:[%s5 + $0x10] sm:$0xf]
    %v1826 = vld [vmem:[%s5 + $0x14] sm:$0xf]
    %v1827 = vld [vmem:[%s5 + $0x18] sm:$0xf]
    %v1828 = vld [vmem:[%s5 + $0x1c] sm:$0xf]
    %v1829 = vld [vmem:[%s6] sm:$0x1]
    %v1831 = vperm.slane %v1829, 0
    %v1841 = vunpack.c.l.b16 %v1821
    %v1842 = vunpack.c.l.b16 %v1822
    %v1843 = vunpack.c.l.b16 %v1823
    %v1844 = vunpack.c.l.b16 %v1824
    %v1845 = vunpack.c.l.b16 %v1825
    %v1846 = vunpack.c.l.b16 %v1826
    %v1847 = vunpack.c.l.b16 %v1827
    %v1848 = vunpack.c.l.b16 %v1828
    %v1849 = vpack.c.b16 %v1842, %v1841
    %v1850 = vpack.c.b16 %v1844, %v1843
    %v1851 = vpack.c.b16 %v1846, %v1845
    %v1852 = vpack.c.b16 %v1848, %v1847
    %vm1857 = vcmask 523264
    %v1859 = vsel %vm1857, %v1805, 0
    %v1862 = vsel %vm1857, %v1806, 0
    %v1865 = vsel %vm1857, %v1807, 0
    %v1868 = vsel %vm1857, %v1808, 0
    %v1871 = vsel %vm1857, %v1809, 0
    %v1874 = vsel %vm1857, %v1810, 0
    %v1877 = vsel %vm1857, %v1811, 0
    %v1880 = vsel %vm1857, %v1812, 0
    %v1883 = vsel %vm1857, %v1813, 0
    %v1886 = vsel %vm1857, %v1814, 0
    %v1889 = vsel %vm1857, %v1815, 0
    %v1892 = vsel %vm1857, %v1816, 0
    %v1895 = vsel %vm1857, %v1817, 0
    %v1898 = vsel %vm1857, %v1818, 0
    %v1901 = vsel %vm1857, %v1819, 0
    %v1904 = vsel %vm1857, %v1820, 0
    %1906 = vmatpush.bf16.msra.mxu0 0
    %1907 = vmatpush.bf16.msra.mxu0 0
    %1908 = vmatpush.bf16.msra.mxu0 0
    %1909 = vmatpush.bf16.msra.mxu0 0
    %1910 = vmatpush.bf16.msra.mxu0 %v1852
    %1911 = vmatpush.bf16.msra.mxu0 %v1851
    %1912 = vmatpush.bf16.msra.mxu0 %v1850
    %1913 = vmatpush.bf16.msra.mxu0 %v1849
    %1914 = vmatmul.bf16.gmra.mxu0 %v1859
    %v1915 = vpop.f32.mrf.mxu0
    %v1916 = vadd.f32 %v1831, %v1915
    %v1917 = vpop.f32.mrf.mxu0
    %v1918 = vadd.f32 %v1831, %v1917
    %1919 = vmatmul.bf16.gmra.mxu0 %v1862
    %v1920 = vpop.f32.mrf.mxu0
    %v1921 = vadd.f32 %v1831, %v1920
    %v1922 = vpop.f32.mrf.mxu0
    %v1923 = vadd.f32 %v1831, %v1922
    %1924 = vmatmul.bf16.gmra.mxu0 %v1865
    %v1925 = vpop.f32.mrf.mxu0
    %v1926 = vadd.f32 %v1831, %v1925
    %v1927 = vpop.f32.mrf.mxu0
    %v1928 = vadd.f32 %v1831, %v1927
    %1929 = vmatmul.bf16.gmra.mxu0 %v1868
    %v1930 = vpop.f32.mrf.mxu0
    %v1931 = vadd.f32 %v1831, %v1930
    %v1932 = vpop.f32.mrf.mxu0
    %v1933 = vadd.f32 %v1831, %v1932
    %1934 = vmatmul.bf16.gmra.mxu0 %v1871
    %v1935 = vpop.f32.mrf.mxu0
    %v1936 = vadd.f32 %v1831, %v1935
    %v1937 = vpop.f32.mrf.mxu0
    %v1938 = vadd.f32 %v1831, %v1937
    %1939 = vmatmul.bf16.gmra.mxu0 %v1874
    %v1940 = vpop.f32.mrf.mxu0
    %v1941 = vadd.f32 %v1831, %v1940
    %v1942 = vpop.f32.mrf.mxu0
    %v1943 = vadd.f32 %v1831, %v1942
    %1944 = vmatmul.bf16.gmra.mxu0 %v1877
    %v1945 = vpop.f32.mrf.mxu0
    %v1946 = vadd.f32 %v1831, %v1945
    %v1947 = vpop.f32.mrf.mxu0
    %v1948 = vadd.f32 %v1831, %v1947
    %1949 = vmatmul.bf16.gmra.mxu0 %v1880
    %v1950 = vpop.f32.mrf.mxu0
    %v1951 = vadd.f32 %v1831, %v1950
    %v1952 = vpop.f32.mrf.mxu0
    %v1953 = vadd.f32 %v1831, %v1952
    %1954 = vmatmul.bf16.gmra.mxu0 %v1883
    %v1955 = vpop.f32.mrf.mxu0
    %v1956 = vadd.f32 %v1831, %v1955
    %v1957 = vpop.f32.mrf.mxu0
    %v1958 = vadd.f32 %v1831, %v1957
    %1959 = vmatmul.bf16.gmra.mxu0 %v1886
    %v1960 = vpop.f32.mrf.mxu0
    %v1961 = vadd.f32 %v1831, %v1960
    %v1962 = vpop.f32.mrf.mxu0
    %v1963 = vadd.f32 %v1831, %v1962
    %1964 = vmatmul.bf16.gmra.mxu0 %v1889
    %v1965 = vpop.f32.mrf.mxu0
    %v1966 = vadd.f32 %v1831, %v1965
    %v1967 = vpop.f32.mrf.mxu0
    %v1968 = vadd.f32 %v1831, %v1967
    %1969 = vmatmul.bf16.gmra.mxu0 %v1892
    %v1970 = vpop.f32.mrf.mxu0
    %v1971 = vadd.f32 %v1831, %v1970
    %v1972 = vpop.f32.mrf.mxu0
    %v1973 = vadd.f32 %v1831, %v1972
    %1974 = vmatmul.bf16.gmra.mxu0 %v1895
    %v1975 = vpop.f32.mrf.mxu0
    %v1976 = vadd.f32 %v1831, %v1975
    %v1977 = vpop.f32.mrf.mxu0
    %v1978 = vadd.f32 %v1831, %v1977
    %1979 = vmatmul.bf16.gmra.mxu0 %v1898
    %v1980 = vpop.f32.mrf.mxu0
    %v1981 = vadd.f32 %v1831, %v1980
    %v1982 = vpop.f32.mrf.mxu0
    %v1983 = vadd.f32 %v1831, %v1982
    %1984 = vmatmul.bf16.gmra.mxu0 %v1901
    %v1985 = vpop.f32.mrf.mxu0
    %v1986 = vadd.f32 %v1831, %v1985
    %v1987 = vpop.f32.mrf.mxu0
    %v1988 = vadd.f32 %v1831, %v1987
    %1989 = vmatmul.bf16.gmra.mxu0 %v1904
    %v1990 = vpop.f32.mrf.mxu0
    %v1991 = vadd.f32 %v1831, %v1990
    %v1992 = vpop.f32.mrf.mxu0
    %v1993 = vadd.f32 %v1831, %v1992
    %1994 = vdwg.mxu0
    %vm1995 = vcmp.gt.f32.partialorder %v1916, 0.0
    %vm1996 = vcmp.gt.f32.partialorder %v1918, 0.0
    %vm1997 = vcmp.gt.f32.partialorder %v1921, 0.0
    %vm1998 = vcmp.gt.f32.partialorder %v1923, 0.0
    %vm1999 = vcmp.gt.f32.partialorder %v1926, 0.0
    %vm2000 = vcmp.gt.f32.partialorder %v1928, 0.0
    %vm2001 = vcmp.gt.f32.partialorder %v1931, 0.0
    %vm2002 = vcmp.gt.f32.partialorder %v1933, 0.0
    %vm2003 = vcmp.gt.f32.partialorder %v1936, 0.0
    %vm2004 = vcmp.gt.f32.partialorder %v1938, 0.0
    %vm2005 = vcmp.gt.f32.partialorder %v1941, 0.0
    %vm2006 = vcmp.gt.f32.partialorder %v1943, 0.0
    %vm2007 = vcmp.gt.f32.partialorder %v1946, 0.0
    %vm2008 = vcmp.gt.f32.partialorder %v1948, 0.0
    %vm2009 = vcmp.gt.f32.partialorder %v1951, 0.0
    %vm2010 = vcmp.gt.f32.partialorder %v1953, 0.0
    %vm2011 = vcmp.gt.f32.partialorder %v1956, 0.0
    %vm2012 = vcmp.gt.f32.partialorder %v1958, 0.0
    %vm2013 = vcmp.gt.f32.partialorder %v1961, 0.0
    %vm2014 = vcmp.gt.f32.partialorder %v1963, 0.0
    %vm2015 = vcmp.gt.f32.partialorder %v1966, 0.0
    %vm2016 = vcmp.gt.f32.partialorder %v1968, 0.0
    %vm2017 = vcmp.gt.f32.partialorder %v1971, 0.0
    %vm2018 = vcmp.gt.f32.partialorder %v1973, 0.0
    %vm2019 = vcmp.gt.f32.partialorder %v1976, 0.0
    %vm2020 = vcmp.gt.f32.partialorder %v1978, 0.0
    %vm2021 = vcmp.gt.f32.partialorder %v1981, 0.0
    %vm2022 = vcmp.gt.f32.partialorder %v1983, 0.0
    %vm2023 = vcmp.gt.f32.partialorder %v1986, 0.0
    %vm2024 = vcmp.gt.f32.partialorder %v1988, 0.0
    %vm2025 = vcmp.gt.f32.partialorder %v1991, 0.0
    %vm2026 = vcmp.gt.f32.partialorder %v1993, 0.0
    %v2027 = vmul.f32 %v1916, 0.2
    %v2028 = vmul.f32 %v1918, 0.2
    %v2029 = vmul.f32 %v1921, 0.2
    %v2030 = vmul.f32 %v1923, 0.2
    %v2031 = vmul.f32 %v1926, 0.2
    %v2032 = vmul.f32 %v1928, 0.2
    %v2033 = vmul.f32 %v1931, 0.2
    %v2034 = vmul.f32 %v1933, 0.2
    %v2035 = vmul.f32 %v1936, 0.2
    %v2036 = vmul.f32 %v1938, 0.2
    %v2037 = vmul.f32 %v1941, 0.2
    %v2038 = vmul.f32 %v1943, 0.2
    %v2039 = vmul.f32 %v1946, 0.2
    %v2040 = vmul.f32 %v1948, 0.2
    %v2041 = vmul.f32 %v1951, 0.2
    %v2042 = vmul.f32 %v1953, 0.2
    %v2043 = vmul.f32 %v1956, 0.2
    %v2044 = vmul.f32 %v1958, 0.2
    %v2045 = vmul.f32 %v1961, 0.2
    %v2046 = vmul.f32 %v1963, 0.2
    %v2047 = vmul.f32 %v1966, 0.2
    %v2048 = vmul.f32 %v1968, 0.2
    %v2049 = vmul.f32 %v1971, 0.2
    %v2050 = vmul.f32 %v1973, 0.2
    %v2051 = vmul.f32 %v1976, 0.2
    %v2052 = vmul.f32 %v1978, 0.2
    %v2053 = vmul.f32 %v1981, 0.2
    %v2054 = vmul.f32 %v1983, 0.2
    %v2055 = vmul.f32 %v1986, 0.2
    %v2056 = vmul.f32 %v1988, 0.2
    %v2057 = vmul.f32 %v1991, 0.2
    %v2058 = vmul.f32 %v1993, 0.2
    %v2059 = vsel %vm1995, %v1916, %v2027
    %v2060 = vsel %vm1996, %v1918, %v2028
    %v2061 = vsel %vm1997, %v1921, %v2029
    %v2062 = vsel %vm1998, %v1923, %v2030
    %v2063 = vsel %vm1999, %v1926, %v2031
    %v2064 = vsel %vm2000, %v1928, %v2032
    %v2065 = vsel %vm2001, %v1931, %v2033
    %v2066 = vsel %vm2002, %v1933, %v2034
    %v2067 = vsel %vm2003, %v1936, %v2035
    %v2068 = vsel %vm2004, %v1938, %v2036
    %v2069 = vsel %vm2005, %v1941, %v2037
    %v2070 = vsel %vm2006, %v1943, %v2038
    %v2071 = vsel %vm2007, %v1946, %v2039
    %v2072 = vsel %vm2008, %v1948, %v2040
    %v2073 = vsel %vm2009, %v1951, %v2041
    %v2074 = vsel %vm2010, %v1953, %v2042
    %v2075 = vsel %vm2011, %v1956, %v2043
    %v2076 = vsel %vm2012, %v1958, %v2044
    %v2077 = vsel %vm2013, %v1961, %v2045
    %v2078 = vsel %vm2014, %v1963, %v2046
    %v2079 = vsel %vm2015, %v1966, %v2047
    %v2080 = vsel %vm2016, %v1968, %v2048
    %v2081 = vsel %vm2017, %v1971, %v2049
    %v2082 = vsel %vm2018, %v1973, %v2050
    %v2083 = vsel %vm2019, %v1976, %v2051
    %v2084 = vsel %vm2020, %v1978, %v2052
    %v2085 = vsel %vm2021, %v1981, %v2053
    %v2086 = vsel %vm2022, %v1983, %v2054
    %v2087 = vsel %vm2023, %v1986, %v2055
    %v2088 = vsel %vm2024, %v1988, %v2056
    %v2089 = vsel %vm2025, %v1991, %v2057
    %v2090 = vsel %vm2026, %v1993, %v2058
    %v2091 = vld [vmem:[%s7] sm:$0xf]
    %v2092 = vpack.c.bf16 %v2060, %v2059
    %v2093 = vpack.c.bf16 %v2062, %v2061
    %v2094 = vpack.c.bf16 %v2064, %v2063
    %v2095 = vpack.c.bf16 %v2066, %v2065
    %v2096 = vpack.c.bf16 %v2068, %v2067
    %v2097 = vpack.c.bf16 %v2070, %v2069
    %v2098 = vpack.c.bf16 %v2072, %v2071
    %v2099 = vpack.c.bf16 %v2074, %v2073
    %v2100 = vpack.c.bf16 %v2076, %v2075
    %v2101 = vpack.c.bf16 %v2078, %v2077
    %v2102 = vpack.c.bf16 %v2080, %v2079
    %v2103 = vpack.c.bf16 %v2082, %v2081
    %v2104 = vpack.c.bf16 %v2084, %v2083
    %v2105 = vpack.c.bf16 %v2086, %v2085
    %v2106 = vpack.c.bf16 %v2088, %v2087
    %v2107 = vpack.c.bf16 %v2090, %v2089
    %vm2108 = vcmask 261120
    %v2110 = vsel %vm2108, %v2091, 0
    %v2113 = vsel %vm2108, %v2092, 0
    %v2116 = vsel %vm2108, %v2093, 0
    %v2119 = vsel %vm2108, %v2094, 0
    %v2122 = vsel %vm2108, %v2095, 0
    %v2125 = vsel %vm2108, %v2096, 0
    %v2128 = vsel %vm2108, %v2097, 0
    %v2131 = vsel %vm2108, %v2098, 0
    %v2134 = vsel %vm2108, %v2099, 0
    %v2137 = vsel %vm2108, %v2100, 0
    %v2140 = vsel %vm2108, %v2101, 0
    %v2143 = vsel %vm2108, %v2102, 0
    %v2146 = vsel %vm2108, %v2103, 0
    %v2149 = vsel %vm2108, %v2104, 0
    %v2152 = vsel %vm2108, %v2105, 0
    %v2155 = vsel %vm2108, %v2106, 0
    %v2158 = vsel %vm2108, %v2107, 0
    %2160 = vmatpush.bf16.xpose.msra.mxu0 %v2134
    %2161 = vmatpush.bf16.xpose.msra.mxu0 %v2131
    %2162 = vmatpush.bf16.xpose.msra.mxu0 %v2128
    %2163 = vmatpush.bf16.xpose.msra.mxu0 %v2125
    %2164 = vmatpush.bf16.xpose.msra.mxu0 %v2122
    %2165 = vmatpush.bf16.xpose.msra.mxu0 %v2119
    %2166 = vmatpush.bf16.xpose.msra.mxu0 %v2116
    %2167 = vmatpush.bf16.xpose.msra.mxu0 %v2113
    %2168 = vmatmul.bf16.gmra.mxu0 %v2110
    %v2169 = vpop.f32.mrf.mxu0
    %v2170 = vadd.f32 0.0, %v2169
    %v2171 = vpop.f32.mrf.mxu0
    %2172 = vdwg.mxu0
    %2173 = vmatpush.bf16.xpose.msra.mxu0 %v2158
    %2174 = vmatpush.bf16.xpose.msra.mxu0 %v2155
    %2175 = vmatpush.bf16.xpose.msra.mxu0 %v2152
    %2176 = vmatpush.bf16.xpose.msra.mxu0 %v2149
    %2177 = vmatpush.bf16.xpose.msra.mxu0 %v2146
    %2178 = vmatpush.bf16.xpose.msra.mxu0 %v2143
    %2179 = vmatpush.bf16.xpose.msra.mxu0 %v2140
    %2180 = vmatpush.bf16.xpose.msra.mxu0 %v2137
    %2181 = vmatmul.bf16.gmra.mxu0 %v2110
    %v2182 = vpop.f32.mrf.mxu0
    %v2183 = vadd.f32 0.0, %v2182
    %v2184 = vpop.f32.mrf.mxu0
    %2185 = vdwg.mxu0
    %v2186 = vld [vmem:[#allocation2] sm:$0x1]
    %2188 = vset.pattern.permute.xlu0 0
    %2189 = vperm.xlu0 %2188, %v2186
    %v2190 = vpop.permute.xlu0 %2189
    %v2192 = vperm.slane %v2190, 0
    %v2193 = vadd.f32 %v2170, %v2192
    %v2194 = vadd.f32 %v2183, %v2192
    %v2197 = vrot.slane %v2194, 7
    %vm2198 = vcmask 1040384
    %v2199 = vsel %vm2198, %v2193, %v2197
    %v2201 = vlaneseq
    %vm2202 = vcmp.ge.s32.totalorder %v2201, 0
    %vm2203 = vcmp.lt.s32.totalorder %v2201, 256
    %vm2204 = vmand %vm2202, %vm2203
    %2205 = vst.msk [vmem:[#allocation3] sm:$0x3] %vm2204, %v2199
    // Predicated region
    $region38: #{tpu_custom_call.1} parent=1 // pred_check
      _
    $region39: #{tpu_custom_call.1} parent=1 // pred_check_branch
      %2207 = sbr.rel (0) target = $region41
    $region40: #{tpu_custom_call.1} parent=1 // pred_region
      %2209 = vsyncadd [#allocation4], 0
      %s2211 = sshll.u32 [#allocation3], 4
      %s2212 = int_to_ptr.vmem [resolvable:$true] %s2211
      %s2213 = sshll.u32 %s9, 4
      %s2214 = int_to_ptr.hbm [resolvable:$true] %s2213
      %2216 = dma.vmem_to_hbm [thread:$0]  %s2212, 32, %s2214, [#allocation4]
    $region41: #{tpu_custom_call.1} parent=1 // pred_fallthru
      _
    // Predicated region
    $region42: #{tpu_custom_call.1} parent=1 // pred_check
      _
    $region43: #{tpu_custom_call.1} parent=1 // pred_check_branch
      %2218 = sbr.rel (0) target = $region45
    $region44: #{tpu_custom_call.1} parent=1 // pred_region
      %2220 = dma.done [#allocation4], 32
    $region45: #{tpu_custom_call.1} parent=1 // pred_fallthru
      _
    %2221 = vsyncpa [#allocation4], 1

</llo_original>
